<compile_context>
chip_gen: v6e
topology: v6e:2x2x1
jax: 0.10.0
libtpu: 0.0.40
codegen_flags: <defaults>
</compile_context>

<pallas_src>
import jax
import jax.numpy as jnp
from jax.experimental import pallas as pl
from jax.experimental.pallas import tpu as pltpu


def _round_up(x, m):
    return (x + m - 1) // m * m


def encoder_kernel(x_ref, w1_ref, b1_ref, w2_ref, b2_ref, out_ref):
    # x arrives in its native dtype; cast to bf16 right before the MXU.
    x_bf = x_ref[...].astype(jnp.bfloat16)
    # Linear 1: bf16 operands on the MXU, f32 accumulation.
    h = jnp.dot(x_bf, w1_ref[...], preferred_element_type=jnp.float32)
    # Bias add + ReLU in f32 on the VPU.
    h = jnp.maximum(h + b1_ref[...], 0.0)
    # Linear 2: cast activations to bf16 for the MXU, accumulate in f32.
    y = jnp.dot(h.astype(jnp.bfloat16), w2_ref[...],
                preferred_element_type=jnp.float32)
    out_ref[...] = (y + b2_ref[...]).astype(out_ref.dtype)


def prepare_encoder_params(w1, b1, w2, b2):
    """One-time weight prep: pad H/O to lane multiples of 128 and cast weights
    to bf16 (padding is mathematically inert: zero rows/cols contribute
    nothing and survive ReLU). Call once; reuse across forward calls.

    w1 : [D, H]   (transposed vs. PyTorch nn.Linear weight)
    b1 : [H]
    w2 : [H, O]   (O = N*K)
    b2 : [O]
    """
    D, H = w1.shape
    O = w2.shape[1]
    Hp = _round_up(H, 128)   # 300 -> 384
    Op = _round_up(O, 128)   # 36  -> 128
    w1_p = jnp.zeros((D, Hp), jnp.bfloat16).at[:, :H].set(
        w1.astype(jnp.bfloat16))
    b1_p = jnp.zeros((1, Hp), jnp.float32).at[0, :H].set(
        b1.reshape(-1).astype(jnp.float32))
    w2_p = jnp.zeros((Hp, Op), jnp.bfloat16).at[:H, :O].set(
        w2.astype(jnp.bfloat16))
    b2_p = jnp.zeros((1, Op), jnp.float32).at[0, :O].set(
        b2.reshape(-1).astype(jnp.float32))
    return (w1_p, b1_p, w2_p, b2_p, O)


def encoder_forward(x, prepared, *, block_b=None):
    """phi_x = relu(x @ w1 + b1) @ w2 + b2, returns [B, O] in x.dtype."""
    w1_p, b1_p, w2_p, b2_p, O = prepared
    B, D = x.shape
    Hp = w1_p.shape[1]
    Op = w2_p.shape[1]
    assert w1_p.shape[0] == D

    # Batch tile selection:
    #   * small B: one block sized to B (rounded to the 8-sublane multiple),
    #     no wasted rows, no extra grid steps.
    #   * larger B: big tiles (<=1024 rows) to amortize per-step overhead but
    #     always >= 2 grid steps so v7x's 2 TensorCores both get work.
    if block_b is None:
        if B <= 128:
            block_b = _round_up(B, 8)
        else:
            block_b = min(1024, _round_up(pl.cdiv(B, 2), 128))
    grid_b = pl.cdiv(B, block_b)

    out_padded = pl.pallas_call(
        encoder_kernel,
        out_shape=jax.ShapeDtypeStruct((B, Op), x.dtype),
        grid_spec=pltpu.PrefetchScalarGridSpec(
            num_scalar_prefetch=0,
            grid=(grid_b,),
            in_specs=[
                # x streams over the batch in its original layout
                # (last dim == full array dim, so no 128-padding needed).
                pl.BlockSpec((block_b, D), lambda i: (i, 0)),
                pl.BlockSpec((D, Hp), lambda i: (0, 0)),   # W1 (VMEM-resident)
                pl.BlockSpec((1, Hp), lambda i: (0, 0)),   # b1 (resident)
                pl.BlockSpec((Hp, Op), lambda i: (0, 0)),  # W2 (resident)
                pl.BlockSpec((1, Op), lambda i: (0, 0)),   # b2 (resident)
            ],
            out_specs=pl.BlockSpec((block_b, Op), lambda i: (i, 0)),
        ),
        compiler_params=pltpu.CompilerParams(
            dimension_semantics=("parallel",)),
    )(x, w1_p, b1_p, w2_p, b2_p)

    # Only strip the 128-lane output padding; batch is not padded.
    return out_padded[:, :O]


def init_params(key, image_size=784, N=6, K=6, dtype=jnp.float32):
    """Deterministic synthetic params matching the module's shapes
    (weights stored as [in_features, out_features])."""
    hidden = 300
    out_dim = N * K
    k1, k2, k3, k4 = jax.random.split(key, 4)
    lim1 = 1.0 / jnp.sqrt(image_size)
    lim2 = 1.0 / jnp.sqrt(hidden)
    w1 = jax.random.uniform(k1, (image_size, hidden), dtype, -lim1, lim1)
    b1 = jax.random.uniform(k2, (hidden,), dtype, -lim1, lim1)
    w2 = jax.random.uniform(k3, (hidden, out_dim), dtype, -lim2, lim2)
    b2 = jax.random.uniform(k4, (out_dim,), dtype, -lim2, lim2)
    return w1, b1, w2, b2


if __name__ == "__main__":
    key = jax.random.PRNGKey(0)
    kx, kp = jax.random.split(key)

    image_size, N, K = 784, 6, 6
    B = 32
    x = jax.random.uniform(kx, (B, image_size), jnp.float32)  # MNIST-like input
    w1, b1, w2, b2 = init_params(kp, image_size=image_size, N=N, K=K)

    # One-time weight prep (static across forward calls).
    prepared = prepare_encoder_params(w1, b1, w2, b2)

    phi_x = encoder_forward(x, prepared)
    phi_x = jax.block_until_ready(phi_x)
    assert phi_x.shape == (B, N * K)
    assert phi_x.dtype == x.dtype

    # Reference in plain JAX with the same bf16-compute / f32-accumulate recipe.
    xb = x.astype(jnp.bfloat16)
    w1b = w1.astype(jnp.bfloat16)
    w2b = w2.astype(jnp.bfloat16)
    h_ref = jnp.maximum(
        jnp.dot(xb, w1b, preferred_element_type=jnp.float32) + b1, 0.0)
    ref = jnp.dot(h_ref.astype(jnp.bfloat16), w2b,
                  preferred_element_type=jnp.float32) + b2
    assert jnp.allclose(phi_x, ref, atol=2e-2, rtol=2e-2)

    # Loose sanity-check against the full-f32 reference (bf16 MXU precision).
    ref_f32 = jnp.maximum(x @ w1 + b1, 0.0) @ w2 + b2
    assert jnp.allclose(phi_x, ref_f32, atol=1e-1, rtol=1e-1)

    print("KERNEL_OK")
</pallas_src>

<mosaic_0001>
module attributes {stable_mosaic.version = 11 : i64} {
  func.func @encoder_kernel(%arg0: i32, %arg1: memref<32x784xf32, #tpu.memory_space<vmem>>, %arg2: memref<784x384xbf16, #tpu.memory_space<vmem>>, %arg3: memref<1x384xf32, #tpu.memory_space<vmem>>, %arg4: memref<384x128xbf16, #tpu.memory_space<vmem>>, %arg5: memref<1x128xf32, #tpu.memory_space<vmem>>, %arg6: memref<32x128xf32, #tpu.memory_space<vmem>>) attributes {dimension_semantics = [#tpu.dimension_semantics<parallel>], iteration_bounds = array<i64: 1>, scalar_prefetch = 0 : i64, scratch_operands = 0 : i64, tpu.core_type = #tpu.core_type<tc>, window_params = [{transform_indices = @transform_0, window_bounds = array<i64: 32, 784>}, {pipeline_mode = #tpu.pipeline_mode<synchronous>, transform_indices = @transform_1, window_bounds = array<i64: 784, 384>}, {pipeline_mode = #tpu.pipeline_mode<synchronous>, transform_indices = @transform_2, window_bounds = array<i64: 1, 384>}, {pipeline_mode = #tpu.pipeline_mode<synchronous>, transform_indices = @transform_3, window_bounds = array<i64: 384, 128>}, {pipeline_mode = #tpu.pipeline_mode<synchronous>, transform_indices = @transform_4, window_bounds = array<i64: 1, 128>}, {transform_indices = @transform_5, window_bounds = array<i64: 32, 128>}]} {
    %c0 = arith.constant 0 : index
    %c0_0 = arith.constant 0 : index
    %0 = vector.load %arg1[%c0, %c0_0] : memref<32x784xf32, #tpu.memory_space<vmem>>, vector<32x784xf32>
    %1 = arith.truncf %0 : vector<32x784xf32> to vector<32x784xbf16>
    %c0_1 = arith.constant 0 : index
    %c0_2 = arith.constant 0 : index
    %2 = vector.load %arg2[%c0_1, %c0_2] : memref<784x384xbf16, #tpu.memory_space<vmem>>, vector<784x384xbf16>
    %cst = arith.constant dense<0.000000e+00> : vector<32x384xf32>
    %3 = tpu.matmul %1, %2, %cst {dimension_numbers = #tpu.dot_dimension_numbers<[1], [0], [0], [1], [0, 0, 1, 1], [], []>} : vector<32x784xbf16>, vector<784x384xbf16>, vector<32x384xf32> -> vector<32x384xf32>
    %c0_3 = arith.constant 0 : index
    %c0_4 = arith.constant 0 : index
    %4 = vector.load %arg3[%c0_3, %c0_4] : memref<1x384xf32, #tpu.memory_space<vmem>>, vector<1x384xf32>
    %5 = vector.broadcast %4 : vector<1x384xf32> to vector<32x384xf32>
    %6 = arith.addf %3, %5 : vector<32x384xf32>
    %cst_5 = arith.constant 0.000000e+00 : f32
    %7 = vector.broadcast %cst_5 : f32 to vector<32x384xf32>
    %8 = arith.maximumf %6, %7 : vector<32x384xf32>
    %9 = arith.truncf %8 : vector<32x384xf32> to vector<32x384xbf16>
    %c0_6 = arith.constant 0 : index
    %c0_7 = arith.constant 0 : index
    %10 = vector.load %arg4[%c0_6, %c0_7] : memref<384x128xbf16, #tpu.memory_space<vmem>>, vector<384x128xbf16>
    %cst_8 = arith.constant dense<0.000000e+00> : vector<32x128xf32>
    %11 = tpu.matmul %9, %10, %cst_8 {dimension_numbers = #tpu.dot_dimension_numbers<[1], [0], [0], [1], [0, 0, 1, 1], [], []>} : vector<32x384xbf16>, vector<384x128xbf16>, vector<32x128xf32> -> vector<32x128xf32>
    %c0_9 = arith.constant 0 : index
    %c0_10 = arith.constant 0 : index
    %12 = vector.load %arg5[%c0_9, %c0_10] : memref<1x128xf32, #tpu.memory_space<vmem>>, vector<1x128xf32>
    %13 = vector.broadcast %12 : vector<1x128xf32> to vector<32x128xf32>
    %14 = arith.addf %11, %13 : vector<32x128xf32>
    %c0_11 = arith.constant 0 : index
    %c0_12 = arith.constant 0 : index
    %15 = vector.load %arg6[%c0_11, %c0_12] : memref<32x128xf32, #tpu.memory_space<vmem>>, vector<32x128xf32>
    tpu.vector_store %arg6[%c0_11, %c0_12], %14 {strides = array<i32>} : memref<32x128xf32, #tpu.memory_space<vmem>>, vector<32x128xf32>,
    return
  }
  func.func @transform_0(%arg0: i32) -> (i32, i32) {
    %c0_i32 = arith.constant 0 : i32
    %c0_i32_0 = arith.constant 0 : i32
    return %arg0, %c0_i32 : i32, i32
  }
  func.func @transform_1(%arg0: i32) -> (i32, i32) {
    %c0_i32 = arith.constant 0 : i32
    %c0_i32_0 = arith.constant 0 : i32
    %c0_i32_1 = arith.constant 0 : i32
    return %c0_i32, %c0_i32_0 : i32, i32
  }
  func.func @transform_2(%arg0: i32) -> (i32, i32) {
    %c0_i32 = arith.constant 0 : i32
    %c0_i32_0 = arith.constant 0 : i32
    %c0_i32_1 = arith.constant 0 : i32
    return %c0_i32, %c0_i32_0 : i32, i32
  }
  func.func @transform_3(%arg0: i32) -> (i32, i32) {
    %c0_i32 = arith.constant 0 : i32
    %c0_i32_0 = arith.constant 0 : i32
    %c0_i32_1 = arith.constant 0 : i32
    return %c0_i32, %c0_i32_0 : i32, i32
  }
  func.func @transform_4(%arg0: i32) -> (i32, i32) {
    %c0_i32 = arith.constant 0 : i32
    %c0_i32_0 = arith.constant 0 : i32
    %c0_i32_1 = arith.constant 0 : i32
    return %c0_i32, %c0_i32_0 : i32, i32
  }
  func.func @transform_5(%arg0: i32) -> (i32, i32) {
    %c0_i32 = arith.constant 0 : i32
    %c0_i32_0 = arith.constant 0 : i32
    return %arg0, %c0_i32 : i32, i32
  }
}

</mosaic_0001>

<llo_original>
// kernel: tpu_custom_call.1
$region0: #{tpu_custom_call.1}
  #allocation0 [shape = 'u32[]', space=smem, size = 0x4, offset = 0x4, fixed_abs, tag = 'smem constant byte address 0x4 - core index']
  #allocation1 [shape = 'u32[144,128]{1,0:T(1,128)}', space=vmem, size = 0x12000, scoped, tag = 'internal scratch']
  %s0 = inlined_call_operand.hbm [shape: f32[32,784], index: 0, kind: input, shape index: {}]
  %s1 = inlined_call_operand.hbm [shape: bf16[784,384], index: 1, kind: input, shape index: {}]
  %s2 = inlined_call_operand.vmem [shape: f32[1,384], index: 2, kind: input, shape index: {}]
  %s3 = inlined_call_operand.hbm [shape: bf16[384,128], index: 3, kind: input, shape index: {}]
  %s4 = inlined_call_operand.vmem [shape: f32[1,128], index: 4, kind: input, shape index: {}]
  %s5 = inlined_call_operand.hbm [shape: f32[32,128], index: 5, kind: output, shape index: {}]
  %s6 = sld [smem:[#allocation0]]
  $region42: #{tpu_custom_call.1} parent=0
    _
  %s8 = ssub.s32 1, %s6
  %s9 = scalar_select 0, %s8, %s6
  $region1: #{tpu_custom_call.1} parent=0
    #allocation2 [shape = 'u8[114688]{0}', space=vmem, size = 0x1c000, scoped, tag = 'input window, operand 0, single buffered']
    #allocation3 [shape = 's32[1]{0}', space=sflag, size = 0x4, scoped, tag = 'scoped memory for tpu_custom_call.1']
    #allocation4 [shape = 's32[1]{0}', space=sflag, size = 0x4, scoped, tag = 'scoped memory for tpu_custom_call.1']
    #allocation5 [shape = 'u8[602112]{0}', space=vmem, size = 0x93000, scoped, tag = 'input window, operand 1, single buffered']
    #allocation6 [shape = 's32[1]{0}', space=sflag, size = 0x4, scoped, tag = 'scoped memory for tpu_custom_call.1']
    #allocation7 [shape = 'u8[98304]{0}', space=vmem, size = 0x18000, scoped, tag = 'input window, operand 3, single buffered']
    #allocation8 [shape = 'u8[16384]{0}', space=vmem, size = 0x4000, scoped, tag = 'output window, operand 0, single buffered']
    %10 = vsyncpa [#allocation3], 0
    %11 = vsyncpa [#allocation6], 0
    %12 = vsyncpa [#allocation4], 0
    // Predicated region
    $region2: #{tpu_custom_call.1} parent=1 // pred_check
      _
    $region3: #{tpu_custom_call.1} parent=1 // pred_check_branch
      %14 = sbr.rel (0) target = $region5
    $region4: #{tpu_custom_call.1} parent=1 // pred_region
      %s16 = ssub.s32 3584, 3584
      %17 = vsyncadd [#allocation3], %s16
      %s18 = sshll.u32 [#allocation2], 4
      %s19 = int_to_ptr.vmem [resolvable:$true] %s18
      %24 = dma.hbm_to_vmem [thread:$0]  %s0, 3584, %s19, [#allocation3], 896, 896, 56
    $region5: #{tpu_custom_call.1} parent=1 // pred_fallthru
      _
    // Predicated region
    $region6: #{tpu_custom_call.1} parent=1 // pred_check
      _
    $region7: #{tpu_custom_call.1} parent=1 // pred_check_branch
      %26 = sbr.rel (0) target = $region9
    $region8: #{tpu_custom_call.1} parent=1 // pred_region
      %s28 = ssub.s32 18816, 18816
      %29 = vsyncadd [#allocation6], %s28
      %s30 = sshll.u32 [#allocation5], 4
      %s31 = int_to_ptr.vmem [resolvable:$true] %s30
      %36 = dma.hbm_to_vmem [thread:$0]  %s1, 18816, %s31, [#allocation6], 192, 192, 12
    $region9: #{tpu_custom_call.1} parent=1 // pred_fallthru
      _
    // Predicated region
    $region10: #{tpu_custom_call.1} parent=1 // pred_check
      _
    $region11: #{tpu_custom_call.1} parent=1 // pred_check_branch
      %38 = sbr.rel (0) target = $region13
    $region12: #{tpu_custom_call.1} parent=1 // pred_region
      _
    $region13: #{tpu_custom_call.1} parent=1 // pred_fallthru
      _
    // Predicated region
    $region14: #{tpu_custom_call.1} parent=1 // pred_check
      _
    $region15: #{tpu_custom_call.1} parent=1 // pred_check_branch
      %40 = sbr.rel (0) target = $region17
    $region16: #{tpu_custom_call.1} parent=1 // pred_region
      %s42 = ssub.s32 3072, 3072
      %43 = vsyncadd [#allocation6], %s42
      %s44 = sshll.u32 [#allocation7], 4
      %s45 = int_to_ptr.vmem [resolvable:$true] %s44
      %50 = dma.hbm_to_vmem [thread:$0]  %s3, 3072, %s45, [#allocation6], 64, 64, 4
    $region17: #{tpu_custom_call.1} parent=1 // pred_fallthru
      _
    // Predicated region
    $region18: #{tpu_custom_call.1} parent=1 // pred_check
      _
    $region19: #{tpu_custom_call.1} parent=1 // pred_check_branch
      %52 = sbr.rel (0) target = $region21
    $region20: #{tpu_custom_call.1} parent=1 // pred_region
      _
    $region21: #{tpu_custom_call.1} parent=1 // pred_fallthru
      _
    // Predicated region
    $region22: #{tpu_custom_call.1} parent=1 // pred_check
      _
    $region23: #{tpu_custom_call.1} parent=1 // pred_check_branch
      %54 = sbr.rel (0) target = $region25
    $region24: #{tpu_custom_call.1} parent=1 // pred_region
      %55 = dma.done [#allocation3], 3584
    $region25: #{tpu_custom_call.1} parent=1 // pred_fallthru
      _
    // Predicated region
    $region26: #{tpu_custom_call.1} parent=1 // pred_check
      _
    $region27: #{tpu_custom_call.1} parent=1 // pred_check_branch
      %57 = sbr.rel (0) target = $region29
    $region28: #{tpu_custom_call.1} parent=1 // pred_region
      %58 = dma.done [#allocation6], 18816
    $region29: #{tpu_custom_call.1} parent=1 // pred_fallthru
      _
    // Predicated region
    $region30: #{tpu_custom_call.1} parent=1 // pred_check
      _
    $region31: #{tpu_custom_call.1} parent=1 // pred_check_branch
      %60 = sbr.rel (0) target = $region33
    $region32: #{tpu_custom_call.1} parent=1 // pred_region
      %61 = dma.done [#allocation6], 3072
    $region33: #{tpu_custom_call.1} parent=1 // pred_fallthru
      _
    %v63 = vld [vmem:[#allocation2] sm:$0xff]
    %v64 = vld [vmem:[#allocation2 + $0x8] sm:$0xff]
    %v65 = vld [vmem:[#allocation2 + $0x10] sm:$0xff]
    %v66 = vld [vmem:[#allocation2 + $0x18] sm:$0xff]
    %v67 = vld [vmem:[#allocation2 + $0x20] sm:$0xff]
    %v68 = vld [vmem:[#allocation2 + $0x28] sm:$0xff]
    %v69 = vld [vmem:[#allocation2 + $0x30] sm:$0xff]
    %v70 = vld [vmem:[#allocation2 + $0x38] sm:$0xff]
    %v71 = vld [vmem:[#allocation2 + $0x40] sm:$0xff]
    %v72 = vld [vmem:[#allocation2 + $0x48] sm:$0xff]
    %v73 = vld [vmem:[#allocation2 + $0x50] sm:$0xff]
    %v74 = vld [vmem:[#allocation2 + $0x58] sm:$0xff]
    %v75 = vld [vmem:[#allocation2 + $0x60] sm:$0xff]
    %v76 = vld [vmem:[#allocation2 + $0x68] sm:$0xff]
    %v77 = vld [vmem:[#allocation2 + $0x70] sm:$0xff]
    %v78 = vld [vmem:[#allocation2 + $0x78] sm:$0xff]
    %v79 = vld [vmem:[#allocation2 + $0x80] sm:$0xff]
    %v80 = vld [vmem:[#allocation2 + $0x88] sm:$0xff]
    %v81 = vld [vmem:[#allocation2 + $0x90] sm:$0xff]
    %v82 = vld [vmem:[#allocation2 + $0x98] sm:$0xff]
    %v83 = vld [vmem:[#allocation2 + $0xa0] sm:$0xff]
    %v84 = vld [vmem:[#allocation2 + $0xa8] sm:$0xff]
    %v85 = vld [vmem:[#allocation2 + $0xb0] sm:$0xff]
    %v86 = vld [vmem:[#allocation2 + $0xb8] sm:$0xff]
    %v87 = vld [vmem:[#allocation2 + $0xc0] sm:$0xff]
    %v88 = vld [vmem:[#allocation2 + $0xc8] sm:$0xff]
    %v89 = vld [vmem:[#allocation2 + $0xd0] sm:$0xff]
    %v90 = vld [vmem:[#allocation2 + $0xd8] sm:$0xff]
    %v91 = vpack.c.bf16 %v70, %v63
    %v92 = vpack.c.bf16 %v71, %v64
    %v93 = vpack.c.bf16 %v72, %v65
    %v94 = vpack.c.bf16 %v73, %v66
    %v95 = vpack.c.bf16 %v74, %v67
    %v96 = vpack.c.bf16 %v75, %v68
    %v97 = vpack.c.bf16 %v76, %v69
    %v98 = vpack.c.bf16 %v84, %v77
    %v99 = vpack.c.bf16 %v85, %v78
    %v100 = vpack.c.bf16 %v86, %v79
    %v101 = vpack.c.bf16 %v87, %v80
    %v102 = vpack.c.bf16 %v88, %v81
    %v103 = vpack.c.bf16 %v89, %v82
    %v104 = vpack.c.bf16 %v90, %v83
    %v105 = vld [vmem:[#allocation5] sm:$0xff]
    %v106 = vld [vmem:[#allocation5 + $0x8] sm:$0xf]
    %v107 = vld [vmem:[#allocation5 + $0xc] sm:$0xff]
    %v108 = vld [vmem:[#allocation5 + $0x14] sm:$0xf]
    %v109 = vld [vmem:[#allocation5 + $0x18] sm:$0xff]
    %v110 = vld [vmem:[#allocation5 + $0x20] sm:$0xf]
    %v111 = vld [vmem:[#allocation5 + $0x24] sm:$0xff]
    %v112 = vld [vmem:[#allocation5 + $0x2c] sm:$0xf]
    %v113 = vld [vmem:[#allocation5 + $0x30] sm:$0xff]
    %v114 = vld [vmem:[#allocation5 + $0x38] sm:$0xf]
    %v115 = vld [vmem:[#allocation5 + $0x3c] sm:$0xff]
    %v116 = vld [vmem:[#allocation5 + $0x44] sm:$0xf]
    %v117 = vld [vmem:[#allocation5 + $0x48] sm:$0xff]
    %v118 = vld [vmem:[#allocation5 + $0x50] sm:$0xf]
    %v119 = vld [vmem:[#allocation5 + $0x54] sm:$0xff]
    %v120 = vld [vmem:[#allocation5 + $0x5c] sm:$0xf]
    %v121 = vld [vmem:[#allocation5 + $0x60] sm:$0xff]
    %v122 = vld [vmem:[#allocation5 + $0x68] sm:$0xf]
    %v123 = vld [vmem:[#allocation5 + $0x6c] sm:$0xff]
    %v124 = vld [vmem:[#allocation5 + $0x74] sm:$0xf]
    %v125 = vld [vmem:[#allocation5 + $0x78] sm:$0xff]
    %v126 = vld [vmem:[#allocation5 + $0x80] sm:$0xf]
    %v127 = vld [vmem:[#allocation5 + $0x84] sm:$0xff]
    %v128 = vld [vmem:[#allocation5 + $0x8c] sm:$0xf]
    %v129 = vld [vmem:[#allocation5 + $0x90] sm:$0xff]
    %v130 = vld [vmem:[#allocation5 + $0x98] sm:$0xf]
    %v131 = vld [vmem:[#allocation5 + $0x9c] sm:$0xff]
    %v132 = vld [vmem:[#allocation5 + $0xa4] sm:$0xf]
    %v133 = vld [vmem:[#allocation5 + $0xa8] sm:$0xff]
    %v134 = vld [vmem:[#allocation5 + $0xb0] sm:$0xf]
    %v135 = vld [vmem:[#allocation5 + $0xb4] sm:$0xff]
    %v136 = vld [vmem:[#allocation5 + $0xbc] sm:$0xf]
    %v137 = vld [vmem:[#allocation5 + $0xc0] sm:$0xff]
    %v138 = vld [vmem:[#allocation5 + $0xc8] sm:$0xf]
    %v139 = vld [vmem:[#allocation5 + $0xcc] sm:$0xff]
    %v140 = vld [vmem:[#allocation5 + $0xd4] sm:$0xf]
    %v141 = vld [vmem:[#allocation5 + $0xd8] sm:$0xff]
    %v142 = vld [vmem:[#allocation5 + $0xe0] sm:$0xf]
    %v143 = vld [vmem:[#allocation5 + $0xe4] sm:$0xff]
    %v144 = vld [vmem:[#allocation5 + $0xec] sm:$0xf]
    %v145 = vld [vmem:[#allocation5 + $0xf0] sm:$0xff]
    %v146 = vld [vmem:[#allocation5 + $0xf8] sm:$0xf]
    %v147 = vld [vmem:[#allocation5 + $0xfc] sm:$0xff]
    %v148 = vld [vmem:[#allocation5 + $0x104] sm:$0xf]
    %v149 = vld [vmem:[#allocation5 + $0x108] sm:$0xff]
    %v150 = vld [vmem:[#allocation5 + $0x110] sm:$0xf]
    %v151 = vld [vmem:[#allocation5 + $0x114] sm:$0xff]
    %v152 = vld [vmem:[#allocation5 + $0x11c] sm:$0xf]
    %v153 = vld [vmem:[#allocation5 + $0x120] sm:$0xff]
    %v154 = vld [vmem:[#allocation5 + $0x128] sm:$0xf]
    %v155 = vld [vmem:[#allocation5 + $0x12c] sm:$0xff]
    %v156 = vld [vmem:[#allocation5 + $0x134] sm:$0xf]
    %v157 = vld [vmem:[#allocation5 + $0x138] sm:$0xff]
    %v158 = vld [vmem:[#allocation5 + $0x140] sm:$0xf]
    %v159 = vld [vmem:[#allocation5 + $0x144] sm:$0xff]
    %v160 = vld [vmem:[#allocation5 + $0x14c] sm:$0xf]
    %v161 = vld [vmem:[#allocation5 + $0x150] sm:$0xff]
    %v162 = vld [vmem:[#allocation5 + $0x158] sm:$0xf]
    %v163 = vld [vmem:[#allocation5 + $0x15c] sm:$0xff]
    %v164 = vld [vmem:[#allocation5 + $0x164] sm:$0xf]
    %v165 = vld [vmem:[#allocation5 + $0x168] sm:$0xff]
    %v166 = vld [vmem:[#allocation5 + $0x170] sm:$0xf]
    %v167 = vld [vmem:[#allocation5 + $0x174] sm:$0xff]
    %v168 = vld [vmem:[#allocation5 + $0x17c] sm:$0xf]
    %v169 = vld [vmem:[#allocation5 + $0x180] sm:$0xff]
    %v170 = vld [vmem:[#allocation5 + $0x188] sm:$0xf]
    %v171 = vld [vmem:[#allocation5 + $0x18c] sm:$0xff]
    %v172 = vld [vmem:[#allocation5 + $0x194] sm:$0xf]
    %v173 = vld [vmem:[#allocation5 + $0x198] sm:$0xff]
    %v174 = vld [vmem:[#allocation5 + $0x1a0] sm:$0xf]
    %v175 = vld [vmem:[#allocation5 + $0x1a4] sm:$0xff]
    %v176 = vld [vmem:[#allocation5 + $0x1ac] sm:$0xf]
    %v177 = vld [vmem:[#allocation5 + $0x1b0] sm:$0xff]
    %v178 = vld [vmem:[#allocation5 + $0x1b8] sm:$0xf]
    %v179 = vld [vmem:[#allocation5 + $0x1bc] sm:$0xff]
    %v180 = vld [vmem:[#allocation5 + $0x1c4] sm:$0xf]
    %v181 = vld [vmem:[#allocation5 + $0x1c8] sm:$0xff]
    %v182 = vld [vmem:[#allocation5 + $0x1d0] sm:$0xf]
    %v183 = vld [vmem:[#allocation5 + $0x1d4] sm:$0xff]
    %v184 = vld [vmem:[#allocation5 + $0x1dc] sm:$0xf]
    %v185 = vld [vmem:[#allocation5 + $0x1e0] sm:$0xff]
    %v186 = vld [vmem:[#allocation5 + $0x1e8] sm:$0xf]
    %v187 = vld [vmem:[#allocation5 + $0x1ec] sm:$0xff]
    %v188 = vld [vmem:[#allocation5 + $0x1f4] sm:$0xf]
    %v189 = vld [vmem:[#allocation5 + $0x1f8] sm:$0xff]
    %v190 = vld [vmem:[#allocation5 + $0x200] sm:$0xf]
    %v191 = vld [vmem:[#allocation5 + $0x204] sm:$0xff]
    %v192 = vld [vmem:[#allocation5 + $0x20c] sm:$0xf]
    %v193 = vld [vmem:[#allocation5 + $0x210] sm:$0xff]
    %v194 = vld [vmem:[#allocation5 + $0x218] sm:$0xf]
    %v195 = vld [vmem:[#allocation5 + $0x21c] sm:$0xff]
    %v196 = vld [vmem:[#allocation5 + $0x224] sm:$0xf]
    %v197 = vld [vmem:[#allocation5 + $0x228] sm:$0xff]
    %v198 = vld [vmem:[#allocation5 + $0x230] sm:$0xf]
    %v199 = vld [vmem:[#allocation5 + $0x234] sm:$0xff]
    %v200 = vld [vmem:[#allocation5 + $0x23c] sm:$0xf]
    %v201 = vld [vmem:[#allocation5 + $0x240] sm:$0xff]
    %v202 = vld [vmem:[#allocation5 + $0x248] sm:$0xf]
    %v203 = vld [vmem:[#allocation5 + $0x24c] sm:$0xff]
    %v204 = vld [vmem:[#allocation5 + $0x254] sm:$0xf]
    %v205 = vld [vmem:[#allocation5 + $0x258] sm:$0xff]
    %v206 = vld [vmem:[#allocation5 + $0x260] sm:$0xf]
    %v207 = vld [vmem:[#allocation5 + $0x264] sm:$0xff]
    %v208 = vld [vmem:[#allocation5 + $0x26c] sm:$0xf]
    %v209 = vld [vmem:[#allocation5 + $0x270] sm:$0xff]
    %v210 = vld [vmem:[#allocation5 + $0x278] sm:$0xf]
    %v211 = vld [vmem:[#allocation5 + $0x27c] sm:$0xff]
    %v212 = vld [vmem:[#allocation5 + $0x284] sm:$0xf]
    %v213 = vld [vmem:[#allocation5 + $0x288] sm:$0xff]
    %v214 = vld [vmem:[#allocation5 + $0x290] sm:$0xf]
    %v215 = vld [vmem:[#allocation5 + $0x294] sm:$0xff]
    %v216 = vld [vmem:[#allocation5 + $0x29c] sm:$0xf]
    %v217 = vld [vmem:[#allocation5 + $0x2a0] sm:$0xff]
    %v218 = vld [vmem:[#allocation5 + $0x2a8] sm:$0xf]
    %v219 = vld [vmem:[#allocation5 + $0x2ac] sm:$0xff]
    %v220 = vld [vmem:[#allocation5 + $0x2b4] sm:$0xf]
    %v221 = vld [vmem:[#allocation5 + $0x2b8] sm:$0xff]
    %v222 = vld [vmem:[#allocation5 + $0x2c0] sm:$0xf]
    %v223 = vld [vmem:[#allocation5 + $0x2c4] sm:$0xff]
    %v224 = vld [vmem:[#allocation5 + $0x2cc] sm:$0xf]
    %v225 = vld [vmem:[#allocation5 + $0x2d0] sm:$0xff]
    %v226 = vld [vmem:[#allocation5 + $0x2d8] sm:$0xf]
    %v227 = vld [vmem:[#allocation5 + $0x2dc] sm:$0xff]
    %v228 = vld [vmem:[#allocation5 + $0x2e4] sm:$0xf]
    %v229 = vld [vmem:[#allocation5 + $0x2e8] sm:$0xff]
    %v230 = vld [vmem:[#allocation5 + $0x2f0] sm:$0xf]
    %v231 = vld [vmem:[#allocation5 + $0x2f4] sm:$0xff]
    %v232 = vld [vmem:[#allocation5 + $0x2fc] sm:$0xf]
    %v233 = vld [vmem:[#allocation5 + $0x300] sm:$0xff]
    %v234 = vld [vmem:[#allocation5 + $0x308] sm:$0xf]
    %v235 = vld [vmem:[#allocation5 + $0x30c] sm:$0xff]
    %v236 = vld [vmem:[#allocation5 + $0x314] sm:$0xf]
    %v237 = vld [vmem:[#allocation5 + $0x318] sm:$0xff]
    %v238 = vld [vmem:[#allocation5 + $0x320] sm:$0xf]
    %v239 = vld [vmem:[#allocation5 + $0x324] sm:$0xff]
    %v240 = vld [vmem:[#allocation5 + $0x32c] sm:$0xf]
    %v241 = vld [vmem:[#allocation5 + $0x330] sm:$0xff]
    %v242 = vld [vmem:[#allocation5 + $0x338] sm:$0xf]
    %v243 = vld [vmem:[#allocation5 + $0x33c] sm:$0xff]
    %v244 = vld [vmem:[#allocation5 + $0x344] sm:$0xf]
    %v245 = vld [vmem:[#allocation5 + $0x348] sm:$0xff]
    %v246 = vld [vmem:[#allocation5 + $0x350] sm:$0xf]
    %v247 = vld [vmem:[#allocation5 + $0x354] sm:$0xff]
    %v248 = vld [vmem:[#allocation5 + $0x35c] sm:$0xf]
    %v249 = vld [vmem:[#allocation5 + $0x360] sm:$0xff]
    %v250 = vld [vmem:[#allocation5 + $0x368] sm:$0xf]
    %v251 = vld [vmem:[#allocation5 + $0x36c] sm:$0xff]
    %v252 = vld [vmem:[#allocation5 + $0x374] sm:$0xf]
    %v253 = vld [vmem:[#allocation5 + $0x378] sm:$0xff]
    %v254 = vld [vmem:[#allocation5 + $0x380] sm:$0xf]
    %v255 = vld [vmem:[#allocation5 + $0x384] sm:$0xff]
    %v256 = vld [vmem:[#allocation5 + $0x38c] sm:$0xf]
    %v257 = vld [vmem:[#allocation5 + $0x390] sm:$0xff]
    %v258 = vld [vmem:[#allocation5 + $0x398] sm:$0xf]
    %v259 = vld [vmem:[#allocation5 + $0x39c] sm:$0xff]
    %v260 = vld [vmem:[#allocation5 + $0x3a4] sm:$0xf]
    %v261 = vld [vmem:[#allocation5 + $0x3a8] sm:$0xff]
    %v262 = vld [vmem:[#allocation5 + $0x3b0] sm:$0xf]
    %v263 = vld [vmem:[#allocation5 + $0x3b4] sm:$0xff]
    %v264 = vld [vmem:[#allocation5 + $0x3bc] sm:$0xf]
    %v265 = vld [vmem:[#allocation5 + $0x3c0] sm:$0xff]
    %v266 = vld [vmem:[#allocation5 + $0x3c8] sm:$0xf]
    %v267 = vld [vmem:[#allocation5 + $0x3cc] sm:$0xff]
    %v268 = vld [vmem:[#allocation5 + $0x3d4] sm:$0xf]
    %v269 = vld [vmem:[#allocation5 + $0x3d8] sm:$0xff]
    %v270 = vld [vmem:[#allocation5 + $0x3e0] sm:$0xf]
    %v271 = vld [vmem:[#allocation5 + $0x3e4] sm:$0xff]
    %v272 = vld [vmem:[#allocation5 + $0x3ec] sm:$0xf]
    %v273 = vld [vmem:[#allocation5 + $0x3f0] sm:$0xff]
    %v274 = vld [vmem:[#allocation5 + $0x3f8] sm:$0xf]
    %v275 = vld [vmem:[#allocation5 + $0x3fc] sm:$0xff]
    %v276 = vld [vmem:[#allocation5 + $0x404] sm:$0xf]
    %v277 = vld [vmem:[#allocation5 + $0x408] sm:$0xff]
    %v278 = vld [vmem:[#allocation5 + $0x410] sm:$0xf]
    %v279 = vld [vmem:[#allocation5 + $0x414] sm:$0xff]
    %v280 = vld [vmem:[#allocation5 + $0x41c] sm:$0xf]
    %v281 = vld [vmem:[#allocation5 + $0x420] sm:$0xff]
    %v282 = vld [vmem:[#allocation5 + $0x428] sm:$0xf]
    %v283 = vld [vmem:[#allocation5 + $0x42c] sm:$0xff]
    %v284 = vld [vmem:[#allocation5 + $0x434] sm:$0xf]
    %v285 = vld [vmem:[#allocation5 + $0x438] sm:$0xff]
    %v286 = vld [vmem:[#allocation5 + $0x440] sm:$0xf]
    %v287 = vld [vmem:[#allocation5 + $0x444] sm:$0xff]
    %v288 = vld [vmem:[#allocation5 + $0x44c] sm:$0xf]
    %v289 = vld [vmem:[#allocation5 + $0x450] sm:$0xff]
    %v290 = vld [vmem:[#allocation5 + $0x458] sm:$0xf]
    %v291 = vld [vmem:[#allocation5 + $0x45c] sm:$0xff]
    %v292 = vld [vmem:[#allocation5 + $0x464] sm:$0xf]
    %v293 = vld [vmem:[#allocation5 + $0x468] sm:$0xff]
    %v294 = vld [vmem:[#allocation5 + $0x470] sm:$0xf]
    %v295 = vld [vmem:[#allocation5 + $0x474] sm:$0xff]
    %v296 = vld [vmem:[#allocation5 + $0x47c] sm:$0xf]
    %v297 = vld [vmem:[#allocation5 + $0x480] sm:$0xff]
    %v298 = vld [vmem:[#allocation5 + $0x488] sm:$0xf]
    %v299 = vld [vmem:[#allocation5 + $0x48c] sm:$0xff]
    %v300 = vld [vmem:[#allocation5 + $0x494] sm:$0xf]
    %v301 = vld [vmem:[%s2] sm:$0x7]
    %v303 = vlaneseq
    %v304 = vshrl.u32 %v303, 7
    %v305 = vsub.s32 0, %v304
    %v306 = vrot.slane %v301, %v305
    %v307 = vlaneseq
    %v308 = vshrl.u32 %v307, 7
    %v309 = vsub.s32 1, %v308
    %v310 = vrot.slane %v301, %v309
    %v311 = vlaneseq
    %v312 = vshrl.u32 %v311, 7
    %v313 = vsub.s32 2, %v312
    %v314 = vrot.slane %v301, %v313
    %v514 = vunpack.c.l.b16 %v105
    %v515 = vunpack.c.h.b16 %v105
    %v516 = vunpack.c.l.b16 %v106
    %v517 = vunpack.c.l.b16 %v107
    %v518 = vunpack.c.h.b16 %v107
    %v519 = vunpack.c.l.b16 %v108
    %v520 = vunpack.c.l.b16 %v109
    %v521 = vunpack.c.h.b16 %v109
    %v522 = vunpack.c.l.b16 %v110
    %v523 = vunpack.c.l.b16 %v111
    %v524 = vunpack.c.h.b16 %v111
    %v525 = vunpack.c.l.b16 %v112
    %v526 = vunpack.c.l.b16 %v113
    %v527 = vunpack.c.h.b16 %v113
    %v528 = vunpack.c.l.b16 %v114
    %v529 = vunpack.c.l.b16 %v115
    %v530 = vunpack.c.h.b16 %v115
    %v531 = vunpack.c.l.b16 %v116
    %v532 = vunpack.c.l.b16 %v117
    %v533 = vunpack.c.h.b16 %v117
    %v534 = vunpack.c.l.b16 %v118
    %v535 = vunpack.c.l.b16 %v119
    %v536 = vunpack.c.h.b16 %v119
    %v537 = vunpack.c.l.b16 %v120
    %v538 = vunpack.c.l.b16 %v121
    %v539 = vunpack.c.h.b16 %v121
    %v540 = vunpack.c.l.b16 %v122
    %v541 = vunpack.c.l.b16 %v123
    %v542 = vunpack.c.h.b16 %v123
    %v543 = vunpack.c.l.b16 %v124
    %v544 = vunpack.c.l.b16 %v125
    %v545 = vunpack.c.h.b16 %v125
    %v546 = vunpack.c.l.b16 %v126
    %v547 = vunpack.c.l.b16 %v127
    %v548 = vunpack.c.h.b16 %v127
    %v549 = vunpack.c.l.b16 %v128
    %v550 = vunpack.c.l.b16 %v129
    %v551 = vunpack.c.h.b16 %v129
    %v552 = vunpack.c.l.b16 %v130
    %v553 = vunpack.c.l.b16 %v131
    %v554 = vunpack.c.h.b16 %v131
    %v555 = vunpack.c.l.b16 %v132
    %v556 = vunpack.c.l.b16 %v133
    %v557 = vunpack.c.h.b16 %v133
    %v558 = vunpack.c.l.b16 %v134
    %v559 = vunpack.c.l.b16 %v135
    %v560 = vunpack.c.h.b16 %v135
    %v561 = vunpack.c.l.b16 %v136
    %v562 = vunpack.c.l.b16 %v137
    %v563 = vunpack.c.h.b16 %v137
    %v564 = vunpack.c.l.b16 %v138
    %v565 = vunpack.c.l.b16 %v139
    %v566 = vunpack.c.h.b16 %v139
    %v567 = vunpack.c.l.b16 %v140
    %v568 = vunpack.c.l.b16 %v141
    %v569 = vunpack.c.h.b16 %v141
    %v570 = vunpack.c.l.b16 %v142
    %v571 = vunpack.c.l.b16 %v143
    %v572 = vunpack.c.h.b16 %v143
    %v573 = vunpack.c.l.b16 %v144
    %v574 = vunpack.c.l.b16 %v145
    %v575 = vunpack.c.h.b16 %v145
    %v576 = vunpack.c.l.b16 %v146
    %v577 = vunpack.c.l.b16 %v147
    %v578 = vunpack.c.h.b16 %v147
    %v579 = vunpack.c.l.b16 %v148
    %v580 = vunpack.c.l.b16 %v149
    %v581 = vunpack.c.h.b16 %v149
    %v582 = vunpack.c.l.b16 %v150
    %v583 = vunpack.c.l.b16 %v151
    %v584 = vunpack.c.h.b16 %v151
    %v585 = vunpack.c.l.b16 %v152
    %v586 = vunpack.c.l.b16 %v153
    %v587 = vunpack.c.h.b16 %v153
    %v588 = vunpack.c.l.b16 %v154
    %v589 = vunpack.c.l.b16 %v155
    %v590 = vunpack.c.h.b16 %v155
    %v591 = vunpack.c.l.b16 %v156
    %v592 = vunpack.c.l.b16 %v157
    %v593 = vunpack.c.h.b16 %v157
    %v594 = vunpack.c.l.b16 %v158
    %v595 = vunpack.c.l.b16 %v159
    %v596 = vunpack.c.h.b16 %v159
    %v597 = vunpack.c.l.b16 %v160
    %v598 = vunpack.c.l.b16 %v161
    %v599 = vunpack.c.h.b16 %v161
    %v600 = vunpack.c.l.b16 %v162
    %v601 = vunpack.c.l.b16 %v163
    %v602 = vunpack.c.h.b16 %v163
    %v603 = vunpack.c.l.b16 %v164
    %v604 = vunpack.c.l.b16 %v165
    %v605 = vunpack.c.h.b16 %v165
    %v606 = vunpack.c.l.b16 %v166
    %v607 = vunpack.c.l.b16 %v167
    %v608 = vunpack.c.h.b16 %v167
    %v609 = vunpack.c.l.b16 %v168
    %v610 = vunpack.c.l.b16 %v169
    %v611 = vunpack.c.h.b16 %v169
    %v612 = vunpack.c.l.b16 %v170
    %v613 = vunpack.c.l.b16 %v171
    %v614 = vunpack.c.h.b16 %v171
    %v615 = vunpack.c.l.b16 %v172
    %v616 = vunpack.c.l.b16 %v173
    %v617 = vunpack.c.h.b16 %v173
    %v618 = vunpack.c.l.b16 %v174
    %v619 = vunpack.c.l.b16 %v175
    %v620 = vunpack.c.h.b16 %v175
    %v621 = vunpack.c.l.b16 %v176
    %v622 = vunpack.c.l.b16 %v177
    %v623 = vunpack.c.h.b16 %v177
    %v624 = vunpack.c.l.b16 %v178
    %v625 = vunpack.c.l.b16 %v179
    %v626 = vunpack.c.h.b16 %v179
    %v627 = vunpack.c.l.b16 %v180
    %v628 = vunpack.c.l.b16 %v181
    %v629 = vunpack.c.h.b16 %v181
    %v630 = vunpack.c.l.b16 %v182
    %v631 = vunpack.c.l.b16 %v183
    %v632 = vunpack.c.h.b16 %v183
    %v633 = vunpack.c.l.b16 %v184
    %v634 = vunpack.c.l.b16 %v185
    %v635 = vunpack.c.h.b16 %v185
    %v636 = vunpack.c.l.b16 %v186
    %v637 = vunpack.c.l.b16 %v187
    %v638 = vunpack.c.h.b16 %v187
    %v639 = vunpack.c.l.b16 %v188
    %v640 = vunpack.c.l.b16 %v189
    %v641 = vunpack.c.h.b16 %v189
    %v642 = vunpack.c.l.b16 %v190
    %v643 = vunpack.c.l.b16 %v191
    %v644 = vunpack.c.h.b16 %v191
    %v645 = vunpack.c.l.b16 %v192
    %v646 = vunpack.c.l.b16 %v193
    %v647 = vunpack.c.h.b16 %v193
    %v648 = vunpack.c.l.b16 %v194
    %v649 = vunpack.c.l.b16 %v195
    %v650 = vunpack.c.h.b16 %v195
    %v651 = vunpack.c.l.b16 %v196
    %v652 = vunpack.c.l.b16 %v197
    %v653 = vunpack.c.h.b16 %v197
    %v654 = vunpack.c.l.b16 %v198
    %v655 = vunpack.c.l.b16 %v199
    %v656 = vunpack.c.h.b16 %v199
    %v657 = vunpack.c.l.b16 %v200
    %v658 = vunpack.c.l.b16 %v201
    %v659 = vunpack.c.h.b16 %v201
    %v660 = vunpack.c.l.b16 %v202
    %v661 = vunpack.c.l.b16 %v203
    %v662 = vunpack.c.h.b16 %v203
    %v663 = vunpack.c.l.b16 %v204
    %v664 = vunpack.c.l.b16 %v205
    %v665 = vunpack.c.h.b16 %v205
    %v666 = vunpack.c.l.b16 %v206
    %v667 = vunpack.c.l.b16 %v207
    %v668 = vunpack.c.h.b16 %v207
    %v669 = vunpack.c.l.b16 %v208
    %v670 = vunpack.c.l.b16 %v209
    %v671 = vunpack.c.h.b16 %v209
    %v672 = vunpack.c.l.b16 %v210
    %v673 = vunpack.c.l.b16 %v211
    %v674 = vunpack.c.h.b16 %v211
    %v675 = vunpack.c.l.b16 %v212
    %v676 = vunpack.c.l.b16 %v213
    %v677 = vunpack.c.h.b16 %v213
    %v678 = vunpack.c.l.b16 %v214
    %v679 = vunpack.c.l.b16 %v215
    %v680 = vunpack.c.h.b16 %v215
    %v681 = vunpack.c.l.b16 %v216
    %v682 = vunpack.c.l.b16 %v217
    %v683 = vunpack.c.h.b16 %v217
    %v684 = vunpack.c.l.b16 %v218
    %v685 = vunpack.c.l.b16 %v219
    %v686 = vunpack.c.h.b16 %v219
    %v687 = vunpack.c.l.b16 %v220
    %v688 = vunpack.c.l.b16 %v221
    %v689 = vunpack.c.h.b16 %v221
    %v690 = vunpack.c.l.b16 %v222
    %v691 = vunpack.c.l.b16 %v223
    %v692 = vunpack.c.h.b16 %v223
    %v693 = vunpack.c.l.b16 %v224
    %v694 = vunpack.c.l.b16 %v225
    %v695 = vunpack.c.h.b16 %v225
    %v696 = vunpack.c.l.b16 %v226
    %v697 = vunpack.c.l.b16 %v227
    %v698 = vunpack.c.h.b16 %v227
    %v699 = vunpack.c.l.b16 %v228
    %v700 = vunpack.c.l.b16 %v229
    %v701 = vunpack.c.h.b16 %v229
    %v702 = vunpack.c.l.b16 %v230
    %v703 = vunpack.c.l.b16 %v231
    %v704 = vunpack.c.h.b16 %v231
    %v705 = vunpack.c.l.b16 %v232
    %v706 = vunpack.c.l.b16 %v233
    %v707 = vunpack.c.h.b16 %v233
    %v708 = vunpack.c.l.b16 %v234
    %v709 = vunpack.c.l.b16 %v235
    %v710 = vunpack.c.h.b16 %v235
    %v711 = vunpack.c.l.b16 %v236
    %v712 = vunpack.c.l.b16 %v237
    %v713 = vunpack.c.h.b16 %v237
    %v714 = vunpack.c.l.b16 %v238
    %v715 = vunpack.c.l.b16 %v239
    %v716 = vunpack.c.h.b16 %v239
    %v717 = vunpack.c.l.b16 %v240
    %v718 = vunpack.c.l.b16 %v241
    %v719 = vunpack.c.h.b16 %v241
    %v720 = vunpack.c.l.b16 %v242
    %v721 = vunpack.c.l.b16 %v243
    %v722 = vunpack.c.h.b16 %v243
    %v723 = vunpack.c.l.b16 %v244
    %v724 = vunpack.c.l.b16 %v245
    %v725 = vunpack.c.h.b16 %v245
    %v726 = vunpack.c.l.b16 %v246
    %v727 = vunpack.c.l.b16 %v247
    %v728 = vunpack.c.h.b16 %v247
    %v729 = vunpack.c.l.b16 %v248
    %v730 = vunpack.c.l.b16 %v249
    %v731 = vunpack.c.h.b16 %v249
    %v732 = vunpack.c.l.b16 %v250
    %v733 = vunpack.c.l.b16 %v251
    %v734 = vunpack.c.h.b16 %v251
    %v735 = vunpack.c.l.b16 %v252
    %v736 = vunpack.c.l.b16 %v253
    %v737 = vunpack.c.h.b16 %v253
    %v738 = vunpack.c.l.b16 %v254
    %v739 = vunpack.c.l.b16 %v255
    %v740 = vunpack.c.h.b16 %v255
    %v741 = vunpack.c.l.b16 %v256
    %v742 = vunpack.c.l.b16 %v257
    %v743 = vunpack.c.h.b16 %v257
    %v744 = vunpack.c.l.b16 %v258
    %v745 = vunpack.c.l.b16 %v259
    %v746 = vunpack.c.h.b16 %v259
    %v747 = vunpack.c.l.b16 %v260
    %v748 = vunpack.c.l.b16 %v261
    %v749 = vunpack.c.h.b16 %v261
    %v750 = vunpack.c.l.b16 %v262
    %v751 = vunpack.c.l.b16 %v263
    %v752 = vunpack.c.h.b16 %v263
    %v753 = vunpack.c.l.b16 %v264
    %v754 = vunpack.c.l.b16 %v265
    %v755 = vunpack.c.h.b16 %v265
    %v756 = vunpack.c.l.b16 %v266
    %v757 = vunpack.c.l.b16 %v267
    %v758 = vunpack.c.h.b16 %v267
    %v759 = vunpack.c.l.b16 %v268
    %v760 = vunpack.c.l.b16 %v269
    %v761 = vunpack.c.h.b16 %v269
    %v762 = vunpack.c.l.b16 %v270
    %v763 = vunpack.c.l.b16 %v271
    %v764 = vunpack.c.h.b16 %v271
    %v765 = vunpack.c.l.b16 %v272
    %v766 = vunpack.c.l.b16 %v273
    %v767 = vunpack.c.h.b16 %v273
    %v768 = vunpack.c.l.b16 %v274
    %v769 = vunpack.c.l.b16 %v275
    %v770 = vunpack.c.h.b16 %v275
    %v771 = vunpack.c.l.b16 %v276
    %v772 = vunpack.c.l.b16 %v277
    %v773 = vunpack.c.h.b16 %v277
    %v774 = vunpack.c.l.b16 %v278
    %v775 = vunpack.c.l.b16 %v279
    %v776 = vunpack.c.h.b16 %v279
    %v777 = vunpack.c.l.b16 %v280
    %v778 = vunpack.c.l.b16 %v281
    %v779 = vunpack.c.h.b16 %v281
    %v780 = vunpack.c.l.b16 %v282
    %v781 = vunpack.c.l.b16 %v283
    %v782 = vunpack.c.h.b16 %v283
    %v783 = vunpack.c.l.b16 %v284
    %v784 = vunpack.c.l.b16 %v285
    %v785 = vunpack.c.h.b16 %v285
    %v786 = vunpack.c.l.b16 %v286
    %v787 = vunpack.c.l.b16 %v287
    %v788 = vunpack.c.h.b16 %v287
    %v789 = vunpack.c.l.b16 %v288
    %v790 = vunpack.c.l.b16 %v289
    %v791 = vunpack.c.h.b16 %v289
    %v792 = vunpack.c.l.b16 %v290
    %v793 = vunpack.c.l.b16 %v291
    %v794 = vunpack.c.h.b16 %v291
    %v795 = vunpack.c.l.b16 %v292
    %v796 = vunpack.c.l.b16 %v293
    %v797 = vunpack.c.h.b16 %v293
    %v798 = vunpack.c.l.b16 %v294
    %v799 = vunpack.c.l.b16 %v295
    %v800 = vunpack.c.h.b16 %v295
    %v801 = vunpack.c.l.b16 %v296
    %v802 = vunpack.c.l.b16 %v297
    %v803 = vunpack.c.h.b16 %v297
    %v804 = vunpack.c.l.b16 %v298
    %v805 = vunpack.c.l.b16 %v299
    %v806 = vunpack.c.h.b16 %v299
    %v807 = vunpack.c.l.b16 %v300
    %v808 = vpack.c.b16 %v517, %v514
    %v809 = vpack.c.b16 %v518, %v515
    %v810 = vpack.c.b16 %v519, %v516
    %v811 = vpack.c.b16 %v523, %v520
    %v812 = vpack.c.b16 %v524, %v521
    %v813 = vpack.c.b16 %v525, %v522
    %v814 = vpack.c.b16 %v529, %v526
    %v815 = vpack.c.b16 %v530, %v527
    %v816 = vpack.c.b16 %v531, %v528
    %v817 = vpack.c.b16 %v535, %v532
    %v818 = vpack.c.b16 %v536, %v533
    %v819 = vpack.c.b16 %v537, %v534
    %v820 = vpack.c.b16 %v541, %v538
    %v821 = vpack.c.b16 %v542, %v539
    %v822 = vpack.c.b16 %v543, %v540
    %v823 = vpack.c.b16 %v547, %v544
    %v824 = vpack.c.b16 %v548, %v545
    %v825 = vpack.c.b16 %v549, %v546
    %v826 = vpack.c.b16 %v553, %v550
    %v827 = vpack.c.b16 %v554, %v551
    %v828 = vpack.c.b16 %v555, %v552
    %v829 = vpack.c.b16 %v559, %v556
    %v830 = vpack.c.b16 %v560, %v557
    %v831 = vpack.c.b16 %v561, %v558
    %v832 = vpack.c.b16 %v565, %v562
    %v833 = vpack.c.b16 %v566, %v563
    %v834 = vpack.c.b16 %v567, %v564
    %v835 = vpack.c.b16 %v571, %v568
    %v836 = vpack.c.b16 %v572, %v569
    %v837 = vpack.c.b16 %v573, %v570
    %v838 = vpack.c.b16 %v577, %v574
    %v839 = vpack.c.b16 %v578, %v575
    %v840 = vpack.c.b16 %v579, %v576
    %v841 = vpack.c.b16 %v583, %v580
    %v842 = vpack.c.b16 %v584, %v581
    %v843 = vpack.c.b16 %v585, %v582
    %v844 = vpack.c.b16 %v589, %v586
    %v845 = vpack.c.b16 %v590, %v587
    %v846 = vpack.c.b16 %v591, %v588
    %v847 = vpack.c.b16 %v595, %v592
    %v848 = vpack.c.b16 %v596, %v593
    %v849 = vpack.c.b16 %v597, %v594
    %v850 = vpack.c.b16 %v601, %v598
    %v851 = vpack.c.b16 %v602, %v599
    %v852 = vpack.c.b16 %v603, %v600
    %v853 = vpack.c.b16 %v607, %v604
    %v854 = vpack.c.b16 %v608, %v605
    %v855 = vpack.c.b16 %v609, %v606
    %v856 = vpack.c.b16 %v613, %v610
    %v857 = vpack.c.b16 %v614, %v611
    %v858 = vpack.c.b16 %v615, %v612
    %v859 = vpack.c.b16 %v619, %v616
    %v860 = vpack.c.b16 %v620, %v617
    %v861 = vpack.c.b16 %v621, %v618
    %v862 = vpack.c.b16 %v625, %v622
    %v863 = vpack.c.b16 %v626, %v623
    %v864 = vpack.c.b16 %v627, %v624
    %v865 = vpack.c.b16 %v631, %v628
    %v866 = vpack.c.b16 %v632, %v629
    %v867 = vpack.c.b16 %v633, %v630
    %v868 = vpack.c.b16 %v637, %v634
    %v869 = vpack.c.b16 %v638, %v635
    %v870 = vpack.c.b16 %v639, %v636
    %v871 = vpack.c.b16 %v643, %v640
    %v872 = vpack.c.b16 %v644, %v641
    %v873 = vpack.c.b16 %v645, %v642
    %v874 = vpack.c.b16 %v649, %v646
    %v875 = vpack.c.b16 %v650, %v647
    %v876 = vpack.c.b16 %v651, %v648
    %v877 = vpack.c.b16 %v655, %v652
    %v878 = vpack.c.b16 %v656, %v653
    %v879 = vpack.c.b16 %v657, %v654
    %v880 = vpack.c.b16 %v661, %v658
    %v881 = vpack.c.b16 %v662, %v659
    %v882 = vpack.c.b16 %v663, %v660
    %v883 = vpack.c.b16 %v667, %v664
    %v884 = vpack.c.b16 %v668, %v665
    %v885 = vpack.c.b16 %v669, %v666
    %v886 = vpack.c.b16 %v673, %v670
    %v887 = vpack.c.b16 %v674, %v671
    %v888 = vpack.c.b16 %v675, %v672
    %v889 = vpack.c.b16 %v679, %v676
    %v890 = vpack.c.b16 %v680, %v677
    %v891 = vpack.c.b16 %v681, %v678
    %v892 = vpack.c.b16 %v685, %v682
    %v893 = vpack.c.b16 %v686, %v683
    %v894 = vpack.c.b16 %v687, %v684
    %v895 = vpack.c.b16 %v691, %v688
    %v896 = vpack.c.b16 %v692, %v689
    %v897 = vpack.c.b16 %v693, %v690
    %v898 = vpack.c.b16 %v697, %v694
    %v899 = vpack.c.b16 %v698, %v695
    %v900 = vpack.c.b16 %v699, %v696
    %v901 = vpack.c.b16 %v703, %v700
    %v902 = vpack.c.b16 %v704, %v701
    %v903 = vpack.c.b16 %v705, %v702
    %v904 = vpack.c.b16 %v709, %v706
    %v905 = vpack.c.b16 %v710, %v707
    %v906 = vpack.c.b16 %v711, %v708
    %v907 = vpack.c.b16 %v715, %v712
    %v908 = vpack.c.b16 %v716, %v713
    %v909 = vpack.c.b16 %v717, %v714
    %v910 = vpack.c.b16 %v721, %v718
    %v911 = vpack.c.b16 %v722, %v719
    %v912 = vpack.c.b16 %v723, %v720
    %v913 = vpack.c.b16 %v727, %v724
    %v914 = vpack.c.b16 %v728, %v725
    %v915 = vpack.c.b16 %v729, %v726
    %v916 = vpack.c.b16 %v733, %v730
    %v917 = vpack.c.b16 %v734, %v731
    %v918 = vpack.c.b16 %v735, %v732
    %v919 = vpack.c.b16 %v739, %v736
    %v920 = vpack.c.b16 %v740, %v737
    %v921 = vpack.c.b16 %v741, %v738
    %v922 = vpack.c.b16 %v745, %v742
    %v923 = vpack.c.b16 %v746, %v743
    %v924 = vpack.c.b16 %v747, %v744
    %v925 = vpack.c.b16 %v751, %v748
    %v926 = vpack.c.b16 %v752, %v749
    %v927 = vpack.c.b16 %v753, %v750
    %v928 = vpack.c.b16 %v757, %v754
    %v929 = vpack.c.b16 %v758, %v755
    %v930 = vpack.c.b16 %v759, %v756
    %v931 = vpack.c.b16 %v763, %v760
    %v932 = vpack.c.b16 %v764, %v761
    %v933 = vpack.c.b16 %v765, %v762
    %v934 = vpack.c.b16 %v769, %v766
    %v935 = vpack.c.b16 %v770, %v767
    %v936 = vpack.c.b16 %v771, %v768
    %v937 = vpack.c.b16 %v775, %v772
    %v938 = vpack.c.b16 %v776, %v773
    %v939 = vpack.c.b16 %v777, %v774
    %v940 = vpack.c.b16 %v781, %v778
    %v941 = vpack.c.b16 %v782, %v779
    %v942 = vpack.c.b16 %v783, %v780
    %v943 = vpack.c.b16 %v787, %v784
    %v944 = vpack.c.b16 %v788, %v785
    %v945 = vpack.c.b16 %v789, %v786
    %v946 = vpack.c.b16 %v793, %v790
    %v947 = vpack.c.b16 %v794, %v791
    %v948 = vpack.c.b16 %v795, %v792
    %v949 = vpack.c.b16 %v799, %v796
    %v950 = vpack.c.b16 %v800, %v797
    %v951 = vpack.c.b16 %v801, %v798
    %v952 = vpack.c.b16 %v805, %v802
    %v953 = vpack.c.b16 %v806, %v803
    %v954 = vpack.c.b16 %v807, %v804
    %vm1102 = vcmask 130048
    %v1104 = vsel %vm1102, %v97, 0
    %v1107 = vsel %vm1102, %v104, 0
    %1109 = vmatprep.subr.bf16.mxu0 %v830
    %1110 = vmatpush1.bf16.msra.mxu0 %v829
    %1111 = vmatprep.subr.bf16.mxu0 %v827
    %1112 = vmatpush1.bf16.msra.mxu0 %v826
    %1113 = vmatprep.subr.bf16.mxu0 %v824
    %1114 = vmatpush1.bf16.msra.mxu0 %v823
    %1115 = vmatprep.subr.bf16.mxu0 %v821
    %1116 = vmatpush1.bf16.msra.mxu0 %v820
    %1117 = vmatprep.subr.bf16.mxu0 %v818
    %1118 = vmatpush1.bf16.msra.mxu0 %v817
    %1119 = vmatprep.subr.bf16.mxu0 %v815
    %1120 = vmatpush1.bf16.msra.mxu0 %v814
    %1121 = vmatprep.subr.bf16.mxu0 %v812
    %1122 = vmatpush1.bf16.msra.mxu0 %v811
    %1123 = vmatprep.subr.bf16.mxu0 %v809
    %1124 = vmatpush1.bf16.msra.mxu0 %v808
    %1125 = vmatprep.subr.bf16.mxu0 %v854
    %1126 = vmatpush2.bf16.msra.mxu0 %v853
    %1127 = vmatprep.subr.bf16.mxu0 %v851
    %1128 = vmatpush2.bf16.msra.mxu0 %v850
    %1129 = vmatprep.subr.bf16.mxu0 %v848
    %1130 = vmatpush2.bf16.msra.mxu0 %v847
    %1131 = vmatprep.subr.bf16.mxu0 %v845
    %1132 = vmatpush2.bf16.msra.mxu0 %v844
    %1133 = vmatprep.subr.bf16.mxu0 %v842
    %1134 = vmatpush2.bf16.msra.mxu0 %v841
    %1135 = vmatprep.subr.bf16.mxu0 %v839
    %1136 = vmatpush2.bf16.msra.mxu0 %v838
    %1137 = vmatprep.subr.bf16.mxu0 %v836
    %1138 = vmatpush2.bf16.msra.mxu0 %v835
    %1139 = vmatprep.subr.bf16.mxu0 %v833
    %1140 = vmatpush2.bf16.msra.mxu0 %v832
    %1141 = vmatprep.mubr.bf16.mxu0 %v92
    %1142 = vmatmul.mubr.bf16.gmra.mxu0 %v91
    %v1143 = vpop.f32.mrf.mxu0
    %v1144 = vadd.f32 %v306, %v1143
    %v1145 = vpop.f32.mrf.mxu0
    %v1146 = vadd.f32 %v310, %v1145
    %v1147 = vpop.f32.mrf.mxu0
    %v1148 = vadd.f32 %v306, %v1147
    %v1149 = vpop.f32.mrf.mxu0
    %v1150 = vadd.f32 %v310, %v1149
    %1151 = vmatprep.mubr.bf16.mxu0 %v99
    %1152 = vmatmul.mubr.bf16.gmra.mxu0 %v98
    %v1153 = vpop.f32.mrf.mxu0
    %v1154 = vadd.f32 %v306, %v1153
    %v1155 = vpop.f32.mrf.mxu0
    %v1156 = vadd.f32 %v310, %v1155
    %v1157 = vpop.f32.mrf.mxu0
    %v1158 = vadd.f32 %v306, %v1157
    %v1159 = vpop.f32.mrf.mxu0
    %v1160 = vadd.f32 %v310, %v1159
    %1161 = vdwg.mxu0
    %1162 = vmatprep.subr.bf16.mxu0 %v878
    %1163 = vmatpush1.bf16.msra.mxu0 %v877
    %1164 = vmatprep.subr.bf16.mxu0 %v875
    %1165 = vmatpush1.bf16.msra.mxu0 %v874
    %1166 = vmatprep.subr.bf16.mxu0 %v872
    %1167 = vmatpush1.bf16.msra.mxu0 %v871
    %1168 = vmatprep.subr.bf16.mxu0 %v869
    %1169 = vmatpush1.bf16.msra.mxu0 %v868
    %1170 = vmatprep.subr.bf16.mxu0 %v866
    %1171 = vmatpush1.bf16.msra.mxu0 %v865
    %1172 = vmatprep.subr.bf16.mxu0 %v863
    %1173 = vmatpush1.bf16.msra.mxu0 %v862
    %1174 = vmatprep.subr.bf16.mxu0 %v860
    %1175 = vmatpush1.bf16.msra.mxu0 %v859
    %1176 = vmatprep.subr.bf16.mxu0 %v857
    %1177 = vmatpush1.bf16.msra.mxu0 %v856
    %1178 = vmatprep.subr.bf16.mxu0 %v902
    %1179 = vmatpush2.bf16.msra.mxu0 %v901
    %1180 = vmatprep.subr.bf16.mxu0 %v899
    %1181 = vmatpush2.bf16.msra.mxu0 %v898
    %1182 = vmatprep.subr.bf16.mxu0 %v896
    %1183 = vmatpush2.bf16.msra.mxu0 %v895
    %1184 = vmatprep.subr.bf16.mxu0 %v893
    %1185 = vmatpush2.bf16.msra.mxu0 %v892
    %1186 = vmatprep.subr.bf16.mxu0 %v890
    %1187 = vmatpush2.bf16.msra.mxu0 %v889
    %1188 = vmatprep.subr.bf16.mxu0 %v887
    %1189 = vmatpush2.bf16.msra.mxu0 %v886
    %1190 = vmatprep.subr.bf16.mxu0 %v884
    %1191 = vmatpush2.bf16.msra.mxu0 %v883
    %1192 = vmatprep.subr.bf16.mxu0 %v881
    %1193 = vmatpush2.bf16.msra.mxu0 %v880
    %1194 = vmatprep.mubr.bf16.mxu0 %v94
    %1195 = vmatmul.mubr.bf16.gmra.mxu0 %v93
    %v1196 = vpop.f32.mrf.mxu0
    %v1197 = vadd.f32 %v1144, %v1196
    %v1198 = vpop.f32.mrf.mxu0
    %v1199 = vadd.f32 %v1146, %v1198
    %v1200 = vpop.f32.mrf.mxu0
    %v1201 = vadd.f32 %v1148, %v1200
    %v1202 = vpop.f32.mrf.mxu0
    %v1203 = vadd.f32 %v1150, %v1202
    %1204 = vmatprep.mubr.bf16.mxu0 %v101
    %1205 = vmatmul.mubr.bf16.gmra.mxu0 %v100
    %v1206 = vpop.f32.mrf.mxu0
    %v1207 = vadd.f32 %v1154, %v1206
    %v1208 = vpop.f32.mrf.mxu0
    %v1209 = vadd.f32 %v1156, %v1208
    %v1210 = vpop.f32.mrf.mxu0
    %v1211 = vadd.f32 %v1158, %v1210
    %v1212 = vpop.f32.mrf.mxu0
    %v1213 = vadd.f32 %v1160, %v1212
    %1214 = vdwg.mxu0
    %1215 = vmatprep.subr.bf16.mxu0 %v926
    %1216 = vmatpush1.bf16.msra.mxu0 %v925
    %1217 = vmatprep.subr.bf16.mxu0 %v923
    %1218 = vmatpush1.bf16.msra.mxu0 %v922
    %1219 = vmatprep.subr.bf16.mxu0 %v920
    %1220 = vmatpush1.bf16.msra.mxu0 %v919
    %1221 = vmatprep.subr.bf16.mxu0 %v917
    %1222 = vmatpush1.bf16.msra.mxu0 %v916
    %1223 = vmatprep.subr.bf16.mxu0 %v914
    %1224 = vmatpush1.bf16.msra.mxu0 %v913
    %1225 = vmatprep.subr.bf16.mxu0 %v911
    %1226 = vmatpush1.bf16.msra.mxu0 %v910
    %1227 = vmatprep.subr.bf16.mxu0 %v908
    %1228 = vmatpush1.bf16.msra.mxu0 %v907
    %1229 = vmatprep.subr.bf16.mxu0 %v905
    %1230 = vmatpush1.bf16.msra.mxu0 %v904
    %1231 = vmatprep.subr.bf16.mxu0 %v950
    %1232 = vmatpush2.bf16.msra.mxu0 %v949
    %1233 = vmatprep.subr.bf16.mxu0 %v947
    %1234 = vmatpush2.bf16.msra.mxu0 %v946
    %1235 = vmatprep.subr.bf16.mxu0 %v944
    %1236 = vmatpush2.bf16.msra.mxu0 %v943
    %1237 = vmatprep.subr.bf16.mxu0 %v941
    %1238 = vmatpush2.bf16.msra.mxu0 %v940
    %1239 = vmatprep.subr.bf16.mxu0 %v938
    %1240 = vmatpush2.bf16.msra.mxu0 %v937
    %1241 = vmatprep.subr.bf16.mxu0 %v935
    %1242 = vmatpush2.bf16.msra.mxu0 %v934
    %1243 = vmatprep.subr.bf16.mxu0 %v932
    %1244 = vmatpush2.bf16.msra.mxu0 %v931
    %1245 = vmatprep.subr.bf16.mxu0 %v929
    %1246 = vmatpush2.bf16.msra.mxu0 %v928
    %1247 = vmatprep.mubr.bf16.mxu0 %v96
    %1248 = vmatmul.mubr.bf16.gmra.mxu0 %v95
    %v1249 = vpop.f32.mrf.mxu0
    %v1250 = vadd.f32 %v1197, %v1249
    %v1251 = vpop.f32.mrf.mxu0
    %v1252 = vadd.f32 %v1199, %v1251
    %v1253 = vpop.f32.mrf.mxu0
    %v1254 = vadd.f32 %v1201, %v1253
    %v1255 = vpop.f32.mrf.mxu0
    %v1256 = vadd.f32 %v1203, %v1255
    %1257 = vmatprep.mubr.bf16.mxu0 %v103
    %1258 = vmatmul.mubr.bf16.gmra.mxu0 %v102
    %v1259 = vpop.f32.mrf.mxu0
    %v1260 = vadd.f32 %v1207, %v1259
    %v1261 = vpop.f32.mrf.mxu0
    %v1262 = vadd.f32 %v1209, %v1261
    %v1263 = vpop.f32.mrf.mxu0
    %v1264 = vadd.f32 %v1211, %v1263
    %v1265 = vpop.f32.mrf.mxu0
    %v1266 = vadd.f32 %v1213, %v1265
    %1267 = vdwg.mxu0
    %1268 = vmatprep.subr.bf16.mxu0 0
    %1269 = vmatpush1.bf16.msra.mxu0 0
    %1270 = vmatprep.subr.bf16.mxu0 0
    %1271 = vmatpush1.bf16.msra.mxu0 0
    %1272 = vmatprep.subr.bf16.mxu0 0
    %1273 = vmatpush1.bf16.msra.mxu0 0
    %1274 = vmatprep.subr.bf16.mxu0 0
    %1275 = vmatpush1.bf16.msra.mxu0 0
    %1276 = vmatprep.subr.bf16.mxu0 0
    %1277 = vmatpush1.bf16.msra.mxu0 0
    %1278 = vmatprep.subr.bf16.mxu0 0
    %1279 = vmatpush1.bf16.msra.mxu0 0
    %1280 = vmatprep.subr.bf16.mxu0 0
    %1281 = vmatpush1.bf16.msra.mxu0 0
    %1282 = vmatprep.subr.bf16.mxu0 %v953
    %1283 = vmatpush1.bf16.msra.mxu0 %v952
    %1284 = vmatprep.subr.bf16.mxu0 0
    %1285 = vmatpush2.bf16.msra.mxu0 0
    %1286 = vmatprep.subr.bf16.mxu0 0
    %1287 = vmatpush2.bf16.msra.mxu0 0
    %1288 = vmatprep.subr.bf16.mxu0 0
    %1289 = vmatpush2.bf16.msra.mxu0 0
    %1290 = vmatprep.subr.bf16.mxu0 0
    %1291 = vmatpush2.bf16.msra.mxu0 0
    %1292 = vmatprep.subr.bf16.mxu0 0
    %1293 = vmatpush2.bf16.msra.mxu0 0
    %1294 = vmatprep.subr.bf16.mxu0 0
    %1295 = vmatpush2.bf16.msra.mxu0 0
    %1296 = vmatprep.subr.bf16.mxu0 0
    %1297 = vmatpush2.bf16.msra.mxu0 0
    %1298 = vmatprep.subr.bf16.mxu0 0
    %1299 = vmatpush2.bf16.msra.mxu0 0
    %1300 = vmatprep.mubr.bf16.mxu0 0
    %1301 = vmatmul.mubr.bf16.gmra.mxu0 %v1104
    %v1302 = vpop.f32.mrf.mxu0
    %v1303 = vadd.f32 %v1250, %v1302
    %v1304 = vpop.f32.mrf.mxu0
    %v1305 = vadd.f32 %v1252, %v1304
    %v1306 = vpop.f32.mrf.mxu0
    %v1307 = vadd.f32 %v1254, %v1306
    %v1308 = vpop.f32.mrf.mxu0
    %v1309 = vadd.f32 %v1256, %v1308
    %1310 = vmatprep.mubr.bf16.mxu0 0
    %1311 = vmatmul.mubr.bf16.gmra.mxu0 %v1107
    %v1312 = vpop.f32.mrf.mxu0
    %v1313 = vadd.f32 %v1260, %v1312
    %v1314 = vpop.f32.mrf.mxu0
    %v1315 = vadd.f32 %v1262, %v1314
    %v1316 = vpop.f32.mrf.mxu0
    %v1317 = vadd.f32 %v1264, %v1316
    %v1318 = vpop.f32.mrf.mxu0
    %v1319 = vadd.f32 %v1266, %v1318
    %1320 = vdwg.mxu0
    %1321 = vmatprep.subr.bf16.mxu0 0
    %1322 = vmatpush1.bf16.msra.mxu0 %v831
    %1323 = vmatprep.subr.bf16.mxu0 0
    %1324 = vmatpush1.bf16.msra.mxu0 %v828
    %1325 = vmatprep.subr.bf16.mxu0 0
    %1326 = vmatpush1.bf16.msra.mxu0 %v825
    %1327 = vmatprep.subr.bf16.mxu0 0
    %1328 = vmatpush1.bf16.msra.mxu0 %v822
    %1329 = vmatprep.subr.bf16.mxu0 0
    %1330 = vmatpush1.bf16.msra.mxu0 %v819
    %1331 = vmatprep.subr.bf16.mxu0 0
    %1332 = vmatpush1.bf16.msra.mxu0 %v816
    %1333 = vmatprep.subr.bf16.mxu0 0
    %1334 = vmatpush1.bf16.msra.mxu0 %v813
    %1335 = vmatprep.subr.bf16.mxu0 0
    %1336 = vmatpush1.bf16.msra.mxu0 %v810
    %1337 = vmatprep.subr.bf16.mxu0 0
    %1338 = vmatpush2.bf16.msra.mxu0 %v855
    %1339 = vmatprep.subr.bf16.mxu0 0
    %1340 = vmatpush2.bf16.msra.mxu0 %v852
    %1341 = vmatprep.subr.bf16.mxu0 0
    %1342 = vmatpush2.bf16.msra.mxu0 %v849
    %1343 = vmatprep.subr.bf16.mxu0 0
    %1344 = vmatpush2.bf16.msra.mxu0 %v846
    %1345 = vmatprep.subr.bf16.mxu0 0
    %1346 = vmatpush2.bf16.msra.mxu0 %v843
    %1347 = vmatprep.subr.bf16.mxu0 0
    %1348 = vmatpush2.bf16.msra.mxu0 %v840
    %1349 = vmatprep.subr.bf16.mxu0 0
    %1350 = vmatpush2.bf16.msra.mxu0 %v837
    %1351 = vmatprep.subr.bf16.mxu0 0
    %1352 = vmatpush2.bf16.msra.mxu0 %v834
    %1353 = vmatprep.mubr.bf16.mxu0 %v92
    %1354 = vmatmul.mubr.bf16.gmra.mxu0 %v91
    %v1355 = vpop.f32.mrf.mxu0
    %v1356 = vadd.f32 %v314, %v1355
    %v1357 = vpop.f32.mrf.mxu0
    %v1358 = vpop.f32.mrf.mxu0
    %v1359 = vadd.f32 %v314, %v1358
    %v1360 = vpop.f32.mrf.mxu0
    %1361 = vmatprep.mubr.bf16.mxu0 %v99
    %1362 = vmatmul.mubr.bf16.gmra.mxu0 %v98
    %v1363 = vpop.f32.mrf.mxu0
    %v1364 = vadd.f32 %v314, %v1363
    %v1365 = vpop.f32.mrf.mxu0
    %v1366 = vpop.f32.mrf.mxu0
    %v1367 = vadd.f32 %v314, %v1366
    %v1368 = vpop.f32.mrf.mxu0
    %1369 = vdwg.mxu0
    %1370 = vmatprep.subr.bf16.mxu0 0
    %1371 = vmatpush1.bf16.msra.mxu0 %v879
    %1372 = vmatprep.subr.bf16.mxu0 0
    %1373 = vmatpush1.bf16.msra.mxu0 %v876
    %1374 = vmatprep.subr.bf16.mxu0 0
    %1375 = vmatpush1.bf16.msra.mxu0 %v873
    %1376 = vmatprep.subr.bf16.mxu0 0
    %1377 = vmatpush1.bf16.msra.mxu0 %v870
    %1378 = vmatprep.subr.bf16.mxu0 0
    %1379 = vmatpush1.bf16.msra.mxu0 %v867
    %1380 = vmatprep.subr.bf16.mxu0 0
    %1381 = vmatpush1.bf16.msra.mxu0 %v864
    %1382 = vmatprep.subr.bf16.mxu0 0
    %1383 = vmatpush1.bf16.msra.mxu0 %v861
    %1384 = vmatprep.subr.bf16.mxu0 0
    %1385 = vmatpush1.bf16.msra.mxu0 %v858
    %1386 = vmatprep.subr.bf16.mxu0 0
    %1387 = vmatpush2.bf16.msra.mxu0 %v903
    %1388 = vmatprep.subr.bf16.mxu0 0
    %1389 = vmatpush2.bf16.msra.mxu0 %v900
    %1390 = vmatprep.subr.bf16.mxu0 0
    %1391 = vmatpush2.bf16.msra.mxu0 %v897
    %1392 = vmatprep.subr.bf16.mxu0 0
    %1393 = vmatpush2.bf16.msra.mxu0 %v894
    %1394 = vmatprep.subr.bf16.mxu0 0
    %1395 = vmatpush2.bf16.msra.mxu0 %v891
    %1396 = vmatprep.subr.bf16.mxu0 0
    %1397 = vmatpush2.bf16.msra.mxu0 %v888
    %1398 = vmatprep.subr.bf16.mxu0 0
    %1399 = vmatpush2.bf16.msra.mxu0 %v885
    %1400 = vmatprep.subr.bf16.mxu0 0
    %1401 = vmatpush2.bf16.msra.mxu0 %v882
    %1402 = vmatprep.mubr.bf16.mxu0 %v94
    %1403 = vmatmul.mubr.bf16.gmra.mxu0 %v93
    %v1404 = vpop.f32.mrf.mxu0
    %v1405 = vadd.f32 %v1356, %v1404
    %v1406 = vpop.f32.mrf.mxu0
    %v1407 = vpop.f32.mrf.mxu0
    %v1408 = vadd.f32 %v1359, %v1407
    %v1409 = vpop.f32.mrf.mxu0
    %1410 = vmatprep.mubr.bf16.mxu0 %v101
    %1411 = vmatmul.mubr.bf16.gmra.mxu0 %v100
    %v1412 = vpop.f32.mrf.mxu0
    %v1413 = vadd.f32 %v1364, %v1412
    %v1414 = vpop.f32.mrf.mxu0
    %v1415 = vpop.f32.mrf.mxu0
    %v1416 = vadd.f32 %v1367, %v1415
    %v1417 = vpop.f32.mrf.mxu0
    %1418 = vdwg.mxu0
    %1419 = vmatprep.subr.bf16.mxu0 0
    %1420 = vmatpush1.bf16.msra.mxu0 %v927
    %1421 = vmatprep.subr.bf16.mxu0 0
    %1422 = vmatpush1.bf16.msra.mxu0 %v924
    %1423 = vmatprep.subr.bf16.mxu0 0
    %1424 = vmatpush1.bf16.msra.mxu0 %v921
    %1425 = vmatprep.subr.bf16.mxu0 0
    %1426 = vmatpush1.bf16.msra.mxu0 %v918
    %1427 = vmatprep.subr.bf16.mxu0 0
    %1428 = vmatpush1.bf16.msra.mxu0 %v915
    %1429 = vmatprep.subr.bf16.mxu0 0
    %1430 = vmatpush1.bf16.msra.mxu0 %v912
    %1431 = vmatprep.subr.bf16.mxu0 0
    %1432 = vmatpush1.bf16.msra.mxu0 %v909
    %1433 = vmatprep.subr.bf16.mxu0 0
    %1434 = vmatpush1.bf16.msra.mxu0 %v906
    %1435 = vmatprep.subr.bf16.mxu0 0
    %1436 = vmatpush2.bf16.msra.mxu0 %v951
    %1437 = vmatprep.subr.bf16.mxu0 0
    %1438 = vmatpush2.bf16.msra.mxu0 %v948
    %1439 = vmatprep.subr.bf16.mxu0 0
    %1440 = vmatpush2.bf16.msra.mxu0 %v945
    %1441 = vmatprep.subr.bf16.mxu0 0
    %1442 = vmatpush2.bf16.msra.mxu0 %v942
    %1443 = vmatprep.subr.bf16.mxu0 0
    %1444 = vmatpush2.bf16.msra.mxu0 %v939
    %1445 = vmatprep.subr.bf16.mxu0 0
    %1446 = vmatpush2.bf16.msra.mxu0 %v936
    %1447 = vmatprep.subr.bf16.mxu0 0
    %1448 = vmatpush2.bf16.msra.mxu0 %v933
    %1449 = vmatprep.subr.bf16.mxu0 0
    %1450 = vmatpush2.bf16.msra.mxu0 %v930
    %1451 = vmatprep.mubr.bf16.mxu0 %v96
    %1452 = vmatmul.mubr.bf16.gmra.mxu0 %v95
    %v1453 = vpop.f32.mrf.mxu0
    %v1454 = vadd.f32 %v1405, %v1453
    %v1455 = vpop.f32.mrf.mxu0
    %v1456 = vpop.f32.mrf.mxu0
    %v1457 = vadd.f32 %v1408, %v1456
    %v1458 = vpop.f32.mrf.mxu0
    %1459 = vmatprep.mubr.bf16.mxu0 %v103
    %1460 = vmatmul.mubr.bf16.gmra.mxu0 %v102
    %v1461 = vpop.f32.mrf.mxu0
    %v1462 = vadd.f32 %v1413, %v1461
    %v1463 = vpop.f32.mrf.mxu0
    %v1464 = vpop.f32.mrf.mxu0
    %v1465 = vadd.f32 %v1416, %v1464
    %v1466 = vpop.f32.mrf.mxu0
    %1467 = vdwg.mxu0
    %1468 = vmatprep.subr.bf16.mxu0 0
    %1469 = vmatpush1.bf16.msra.mxu0 0
    %1470 = vmatprep.subr.bf16.mxu0 0
    %1471 = vmatpush1.bf16.msra.mxu0 0
    %1472 = vmatprep.subr.bf16.mxu0 0
    %1473 = vmatpush1.bf16.msra.mxu0 0
    %1474 = vmatprep.subr.bf16.mxu0 0
    %1475 = vmatpush1.bf16.msra.mxu0 0
    %1476 = vmatprep.subr.bf16.mxu0 0
    %1477 = vmatpush1.bf16.msra.mxu0 0
    %1478 = vmatprep.subr.bf16.mxu0 0
    %1479 = vmatpush1.bf16.msra.mxu0 0
    %1480 = vmatprep.subr.bf16.mxu0 0
    %1481 = vmatpush1.bf16.msra.mxu0 0
    %1482 = vmatprep.subr.bf16.mxu0 0
    %1483 = vmatpush1.bf16.msra.mxu0 %v954
    %1484 = vmatprep.subr.bf16.mxu0 0
    %1485 = vmatpush2.bf16.msra.mxu0 0
    %1486 = vmatprep.subr.bf16.mxu0 0
    %1487 = vmatpush2.bf16.msra.mxu0 0
    %1488 = vmatprep.subr.bf16.mxu0 0
    %1489 = vmatpush2.bf16.msra.mxu0 0
    %1490 = vmatprep.subr.bf16.mxu0 0
    %1491 = vmatpush2.bf16.msra.mxu0 0
    %1492 = vmatprep.subr.bf16.mxu0 0
    %1493 = vmatpush2.bf16.msra.mxu0 0
    %1494 = vmatprep.subr.bf16.mxu0 0
    %1495 = vmatpush2.bf16.msra.mxu0 0
    %1496 = vmatprep.subr.bf16.mxu0 0
    %1497 = vmatpush2.bf16.msra.mxu0 0
    %1498 = vmatprep.subr.bf16.mxu0 0
    %1499 = vmatpush2.bf16.msra.mxu0 0
    %1500 = vmatprep.mubr.bf16.mxu0 0
    %1501 = vmatmul.mubr.bf16.gmra.mxu0 %v1104
    %v1502 = vpop.f32.mrf.mxu0
    %v1503 = vadd.f32 %v1454, %v1502
    %v1504 = vpop.f32.mrf.mxu0
    %v1505 = vpop.f32.mrf.mxu0
    %v1506 = vadd.f32 %v1457, %v1505
    %v1507 = vpop.f32.mrf.mxu0
    %1508 = vmatprep.mubr.bf16.mxu0 0
    %1509 = vmatmul.mubr.bf16.gmra.mxu0 %v1107
    %v1510 = vpop.f32.mrf.mxu0
    %v1511 = vadd.f32 %v1462, %v1510
    %v1512 = vpop.f32.mrf.mxu0
    %v1513 = vpop.f32.mrf.mxu0
    %v1514 = vadd.f32 %v1465, %v1513
    %v1515 = vpop.f32.mrf.mxu0
    %1516 = vdwg.mxu0
    %v1517 = vmax.f32 %v1303, 0.0
    %v1518 = vmax.f32 %v1305, 0.0
    %v1519 = vmax.f32 %v1503, 0.0
    %v1520 = vmax.f32 %v1307, 0.0
    %v1521 = vmax.f32 %v1309, 0.0
    %v1522 = vmax.f32 %v1506, 0.0
    %v1523 = vmax.f32 %v1313, 0.0
    %v1524 = vmax.f32 %v1315, 0.0
    %v1525 = vmax.f32 %v1511, 0.0
    %v1526 = vmax.f32 %v1317, 0.0
    %v1527 = vmax.f32 %v1319, 0.0
    %v1528 = vmax.f32 %v1514, 0.0
    %v1529 = vpack.c.bf16 %v1520, %v1517
    %v1530 = vpack.c.bf16 %v1521, %v1518
    %v1531 = vpack.c.bf16 %v1522, %v1519
    %v1532 = vpack.c.bf16 %v1526, %v1523
    %v1533 = vpack.c.bf16 %v1527, %v1524
    %v1534 = vpack.c.bf16 %v1528, %v1525
    %v1535 = vld [vmem:[#allocation7] sm:$0xf]
    %v1536 = vld [vmem:[#allocation7 + $0x4] sm:$0xf]
    %v1537 = vld [vmem:[#allocation7 + $0x8] sm:$0xf]
    %v1538 = vld [vmem:[#allocation7 + $0xc] sm:$0xf]
    %v1539 = vld [vmem:[#allocation7 + $0x10] sm:$0xf]
    %v1540 = vld [vmem:[#allocation7 + $0x14] sm:$0xf]
    %v1541 = vld [vmem:[#allocation7 + $0x18] sm:$0xf]
    %v1542 = vld [vmem:[#allocation7 + $0x1c] sm:$0xf]
    %v1543 = vld [vmem:[#allocation7 + $0x20] sm:$0xf]
    %v1544 = vld [vmem:[#allocation7 + $0x24] sm:$0xf]
    %v1545 = vld [vmem:[#allocation7 + $0x28] sm:$0xf]
    %v1546 = vld [vmem:[#allocation7 + $0x2c] sm:$0xf]
    %v1547 = vld [vmem:[#allocation7 + $0x30] sm:$0xf]
    %v1548 = vld [vmem:[#allocation7 + $0x34] sm:$0xf]
    %v1549 = vld [vmem:[#allocation7 + $0x38] sm:$0xf]
    %v1550 = vld [vmem:[#allocation7 + $0x3c] sm:$0xf]
    %v1551 = vld [vmem:[#allocation7 + $0x40] sm:$0xf]
    %v1552 = vld [vmem:[#allocation7 + $0x44] sm:$0xf]
    %v1553 = vld [vmem:[#allocation7 + $0x48] sm:$0xf]
    %v1554 = vld [vmem:[#allocation7 + $0x4c] sm:$0xf]
    %v1555 = vld [vmem:[#allocation7 + $0x50] sm:$0xf]
    %v1556 = vld [vmem:[#allocation7 + $0x54] sm:$0xf]
    %v1557 = vld [vmem:[#allocation7 + $0x58] sm:$0xf]
    %v1558 = vld [vmem:[#allocation7 + $0x5c] sm:$0xf]
    %v1559 = vld [vmem:[#allocation7 + $0x60] sm:$0xf]
    %v1560 = vld [vmem:[#allocation7 + $0x64] sm:$0xf]
    %v1561 = vld [vmem:[#allocation7 + $0x68] sm:$0xf]
    %v1562 = vld [vmem:[#allocation7 + $0x6c] sm:$0xf]
    %v1563 = vld [vmem:[#allocation7 + $0x70] sm:$0xf]
    %v1564 = vld [vmem:[#allocation7 + $0x74] sm:$0xf]
    %v1565 = vld [vmem:[#allocation7 + $0x78] sm:$0xf]
    %v1566 = vld [vmem:[#allocation7 + $0x7c] sm:$0xf]
    %v1567 = vld [vmem:[#allocation7 + $0x80] sm:$0xf]
    %v1568 = vld [vmem:[#allocation7 + $0x84] sm:$0xf]
    %v1569 = vld [vmem:[#allocation7 + $0x88] sm:$0xf]
    %v1570 = vld [vmem:[#allocation7 + $0x8c] sm:$0xf]
    %v1571 = vld [vmem:[#allocation7 + $0x90] sm:$0xf]
    %v1572 = vld [vmem:[#allocation7 + $0x94] sm:$0xf]
    %v1573 = vld [vmem:[#allocation7 + $0x98] sm:$0xf]
    %v1574 = vld [vmem:[#allocation7 + $0x9c] sm:$0xf]
    %v1575 = vld [vmem:[#allocation7 + $0xa0] sm:$0xf]
    %v1576 = vld [vmem:[#allocation7 + $0xa4] sm:$0xf]
    %v1577 = vld [vmem:[#allocation7 + $0xa8] sm:$0xf]
    %v1578 = vld [vmem:[#allocation7 + $0xac] sm:$0xf]
    %v1579 = vld [vmem:[#allocation7 + $0xb0] sm:$0xf]
    %v1580 = vld [vmem:[#allocation7 + $0xb4] sm:$0xf]
    %v1581 = vld [vmem:[#allocation7 + $0xb8] sm:$0xf]
    %v1582 = vld [vmem:[#allocation7 + $0xbc] sm:$0xf]
    %v1583 = vld [vmem:[%s4] sm:$0x1]
    %v1585 = vlaneseq
    %v1586 = vshrl.u32 %v1585, 7
    %v1587 = vsub.s32 0, %v1586
    %v1588 = vrot.slane %v1583, %v1587
    %v1638 = vunpack.c.l.b16 %v1535
    %v1639 = vunpack.c.l.b16 %v1536
    %v1640 = vunpack.c.l.b16 %v1537
    %v1641 = vunpack.c.l.b16 %v1538
    %v1642 = vunpack.c.l.b16 %v1539
    %v1643 = vunpack.c.l.b16 %v1540
    %v1644 = vunpack.c.l.b16 %v1541
    %v1645 = vunpack.c.l.b16 %v1542
    %v1646 = vunpack.c.l.b16 %v1543
    %v1647 = vunpack.c.l.b16 %v1544
    %v1648 = vunpack.c.l.b16 %v1545
    %v1649 = vunpack.c.l.b16 %v1546
    %v1650 = vunpack.c.l.b16 %v1547
    %v1651 = vunpack.c.l.b16 %v1548
    %v1652 = vunpack.c.l.b16 %v1549
    %v1653 = vunpack.c.l.b16 %v1550
    %v1654 = vunpack.c.l.b16 %v1551
    %v1655 = vunpack.c.l.b16 %v1552
    %v1656 = vunpack.c.l.b16 %v1553
    %v1657 = vunpack.c.l.b16 %v1554
    %v1658 = vunpack.c.l.b16 %v1555
    %v1659 = vunpack.c.l.b16 %v1556
    %v1660 = vunpack.c.l.b16 %v1557
    %v1661 = vunpack.c.l.b16 %v1558
    %v1662 = vunpack.c.l.b16 %v1559
    %v1663 = vunpack.c.l.b16 %v1560
    %v1664 = vunpack.c.l.b16 %v1561
    %v1665 = vunpack.c.l.b16 %v1562
    %v1666 = vunpack.c.l.b16 %v1563
    %v1667 = vunpack.c.l.b16 %v1564
    %v1668 = vunpack.c.l.b16 %v1565
    %v1669 = vunpack.c.l.b16 %v1566
    %v1670 = vunpack.c.l.b16 %v1567
    %v1671 = vunpack.c.l.b16 %v1568
    %v1672 = vunpack.c.l.b16 %v1569
    %v1673 = vunpack.c.l.b16 %v1570
    %v1674 = vunpack.c.l.b16 %v1571
    %v1675 = vunpack.c.l.b16 %v1572
    %v1676 = vunpack.c.l.b16 %v1573
    %v1677 = vunpack.c.l.b16 %v1574
    %v1678 = vunpack.c.l.b16 %v1575
    %v1679 = vunpack.c.l.b16 %v1576
    %v1680 = vunpack.c.l.b16 %v1577
    %v1681 = vunpack.c.l.b16 %v1578
    %v1682 = vunpack.c.l.b16 %v1579
    %v1683 = vunpack.c.l.b16 %v1580
    %v1684 = vunpack.c.l.b16 %v1581
    %v1685 = vunpack.c.l.b16 %v1582
    %v1686 = vpack.c.b16 %v1639, %v1638
    %v1687 = vpack.c.b16 %v1641, %v1640
    %v1688 = vpack.c.b16 %v1643, %v1642
    %v1689 = vpack.c.b16 %v1645, %v1644
    %v1690 = vpack.c.b16 %v1647, %v1646
    %v1691 = vpack.c.b16 %v1649, %v1648
    %v1692 = vpack.c.b16 %v1651, %v1650
    %v1693 = vpack.c.b16 %v1653, %v1652
    %v1694 = vpack.c.b16 %v1655, %v1654
    %v1695 = vpack.c.b16 %v1657, %v1656
    %v1696 = vpack.c.b16 %v1659, %v1658
    %v1697 = vpack.c.b16 %v1661, %v1660
    %v1698 = vpack.c.b16 %v1663, %v1662
    %v1699 = vpack.c.b16 %v1665, %v1664
    %v1700 = vpack.c.b16 %v1667, %v1666
    %v1701 = vpack.c.b16 %v1669, %v1668
    %v1702 = vpack.c.b16 %v1671, %v1670
    %v1703 = vpack.c.b16 %v1673, %v1672
    %v1704 = vpack.c.b16 %v1675, %v1674
    %v1705 = vpack.c.b16 %v1677, %v1676
    %v1706 = vpack.c.b16 %v1679, %v1678
    %v1707 = vpack.c.b16 %v1681, %v1680
    %v1708 = vpack.c.b16 %v1683, %v1682
    %v1709 = vpack.c.b16 %v1685, %v1684
    %1734 = vmatprep.subr.bf16.mxu0 0
    %1735 = vmatpush1.bf16.msra.mxu0 %v1693
    %1736 = vmatprep.subr.bf16.mxu0 0
    %1737 = vmatpush1.bf16.msra.mxu0 %v1692
    %1738 = vmatprep.subr.bf16.mxu0 0
    %1739 = vmatpush1.bf16.msra.mxu0 %v1691
    %1740 = vmatprep.subr.bf16.mxu0 0
    %1741 = vmatpush1.bf16.msra.mxu0 %v1690
    %1742 = vmatprep.subr.bf16.mxu0 0
    %1743 = vmatpush1.bf16.msra.mxu0 %v1689
    %1744 = vmatprep.subr.bf16.mxu0 0
    %1745 = vmatpush1.bf16.msra.mxu0 %v1688
    %1746 = vmatprep.subr.bf16.mxu0 0
    %1747 = vmatpush1.bf16.msra.mxu0 %v1687
    %1748 = vmatprep.subr.bf16.mxu0 0
    %1749 = vmatpush1.bf16.msra.mxu0 %v1686
    %1750 = vmatprep.subr.bf16.mxu0 0
    %1751 = vmatpush2.bf16.msra.mxu0 %v1701
    %1752 = vmatprep.subr.bf16.mxu0 0
    %1753 = vmatpush2.bf16.msra.mxu0 %v1700
    %1754 = vmatprep.subr.bf16.mxu0 0
    %1755 = vmatpush2.bf16.msra.mxu0 %v1699
    %1756 = vmatprep.subr.bf16.mxu0 0
    %1757 = vmatpush2.bf16.msra.mxu0 %v1698
    %1758 = vmatprep.subr.bf16.mxu0 0
    %1759 = vmatpush2.bf16.msra.mxu0 %v1697
    %1760 = vmatprep.subr.bf16.mxu0 0
    %1761 = vmatpush2.bf16.msra.mxu0 %v1696
    %1762 = vmatprep.subr.bf16.mxu0 0
    %1763 = vmatpush2.bf16.msra.mxu0 %v1695
    %1764 = vmatprep.subr.bf16.mxu0 0
    %1765 = vmatpush2.bf16.msra.mxu0 %v1694
    %1766 = vmatprep.mubr.bf16.mxu0 %v1530
    %1767 = vmatmul.mubr.bf16.gmra.mxu0 %v1529
    %v1768 = vpop.f32.mrf.mxu0
    %v1769 = vadd.f32 %v1588, %v1768
    %v1770 = vpop.f32.mrf.mxu0
    %v1771 = vpop.f32.mrf.mxu0
    %v1772 = vadd.f32 %v1588, %v1771
    %v1773 = vpop.f32.mrf.mxu0
    %1774 = vmatprep.mubr.bf16.mxu0 %v1533
    %1775 = vmatmul.mubr.bf16.gmra.mxu0 %v1532
    %v1776 = vpop.f32.mrf.mxu0
    %v1777 = vadd.f32 %v1588, %v1776
    %v1778 = vpop.f32.mrf.mxu0
    %v1779 = vpop.f32.mrf.mxu0
    %v1780 = vadd.f32 %v1588, %v1779
    %v1781 = vpop.f32.mrf.mxu0
    %1782 = vdwg.mxu0
    %1783 = vmatprep.subr.bf16.mxu0 0
    %1784 = vmatpush1.bf16.msra.mxu0 %v1709
    %1785 = vmatprep.subr.bf16.mxu0 0
    %1786 = vmatpush1.bf16.msra.mxu0 %v1708
    %1787 = vmatprep.subr.bf16.mxu0 0
    %1788 = vmatpush1.bf16.msra.mxu0 %v1707
    %1789 = vmatprep.subr.bf16.mxu0 0
    %1790 = vmatpush1.bf16.msra.mxu0 %v1706
    %1791 = vmatprep.subr.bf16.mxu0 0
    %1792 = vmatpush1.bf16.msra.mxu0 %v1705
    %1793 = vmatprep.subr.bf16.mxu0 0
    %1794 = vmatpush1.bf16.msra.mxu0 %v1704
    %1795 = vmatprep.subr.bf16.mxu0 0
    %1796 = vmatpush1.bf16.msra.mxu0 %v1703
    %1797 = vmatprep.subr.bf16.mxu0 0
    %1798 = vmatpush1.bf16.msra.mxu0 %v1702
    %1799 = vmatprep.subr.bf16.mxu0 0
    %1800 = vmatpush2.bf16.msra.mxu0 0
    %1801 = vmatprep.subr.bf16.mxu0 0
    %1802 = vmatpush2.bf16.msra.mxu0 0
    %1803 = vmatprep.subr.bf16.mxu0 0
    %1804 = vmatpush2.bf16.msra.mxu0 0
    %1805 = vmatprep.subr.bf16.mxu0 0
    %1806 = vmatpush2.bf16.msra.mxu0 0
    %1807 = vmatprep.subr.bf16.mxu0 0
    %1808 = vmatpush2.bf16.msra.mxu0 0
    %1809 = vmatprep.subr.bf16.mxu0 0
    %1810 = vmatpush2.bf16.msra.mxu0 0
    %1811 = vmatprep.subr.bf16.mxu0 0
    %1812 = vmatpush2.bf16.msra.mxu0 0
    %1813 = vmatprep.subr.bf16.mxu0 0
    %1814 = vmatpush2.bf16.msra.mxu0 0
    %1815 = vmatprep.mubr.bf16.mxu0 0
    %1816 = vmatmul.mubr.bf16.gmra.mxu0 %v1531
    %v1817 = vpop.f32.mrf.mxu0
    %v1818 = vadd.f32 %v1769, %v1817
    %v1819 = vpop.f32.mrf.mxu0
    %v1820 = vpop.f32.mrf.mxu0
    %v1821 = vadd.f32 %v1772, %v1820
    %v1822 = vpop.f32.mrf.mxu0
    %1823 = vmatprep.mubr.bf16.mxu0 0
    %1824 = vmatmul.mubr.bf16.gmra.mxu0 %v1534
    %v1825 = vpop.f32.mrf.mxu0
    %v1826 = vadd.f32 %v1777, %v1825
    %v1827 = vpop.f32.mrf.mxu0
    %v1828 = vpop.f32.mrf.mxu0
    %v1829 = vadd.f32 %v1780, %v1828
    %v1830 = vpop.f32.mrf.mxu0
    %1831 = vdwg.mxu0
    %1832 = vst [vmem:[#allocation8] sm:$0xff] %v1818
    %1833 = vst [vmem:[#allocation8 + $0x8] sm:$0xff] %v1821
    %1834 = vst [vmem:[#allocation8 + $0x10] sm:$0xff] %v1826
    %1835 = vst [vmem:[#allocation8 + $0x18] sm:$0xff] %v1829
    // Predicated region
    $region34: #{tpu_custom_call.1} parent=1 // pred_check
      _
    $region35: #{tpu_custom_call.1} parent=1 // pred_check_branch
      %1837 = sbr.rel (0) target = $region37
    $region36: #{tpu_custom_call.1} parent=1 // pred_region
      %s1839 = ssub.s32 512, 512
      %1840 = vsyncadd [#allocation4], %s1839
      %s1841 = sshll.u32 [#allocation8], 4
      %s1842 = int_to_ptr.vmem [resolvable:$true] %s1841
      %1847 = dma.vmem_to_hbm [thread:$0]  %s1842, 512, %s5, [#allocation4], 128, 128, 8
    $region37: #{tpu_custom_call.1} parent=1 // pred_fallthru
      _
    // Predicated region
    $region38: #{tpu_custom_call.1} parent=1 // pred_check
      _
    $region39: #{tpu_custom_call.1} parent=1 // pred_check_branch
      %1849 = sbr.rel (0) target = $region41
    $region40: #{tpu_custom_call.1} parent=1 // pred_region
      %1850 = dma.done [#allocation4], 512
    $region41: #{tpu_custom_call.1} parent=1 // pred_fallthru
      _
    %1851 = vsyncpa [#allocation3], 1
    %1852 = vsyncpa [#allocation6], 1
    %1853 = vsyncpa [#allocation4], 1

</llo_original>
